<compile_context>
chip_gen: v7x
topology: tpu7x:2x2x1
jax: 0.10.0
libtpu: 0.0.40
codegen_flags: <defaults>
</compile_context>

<pallas_src>
import functools

import jax
import jax.numpy as jnp
from jax.experimental import pallas as pl
from jax.experimental.pallas import tpu as pltpu


# ---------------------------------------------------------------------------
# Kernel bodies
# ---------------------------------------------------------------------------
def _finalize(acc_ref, w_ref, bias_ref, out_ref, apply_tanh):
    # Single fused epilogue matmul: [agg | self] @ [W_nbr ; W_own]
    out = jnp.dot(acc_ref[...], w_ref[...], preferred_element_type=jnp.float32)
    out = out + bias_ref[...]                       # bias broadcasts over rows
    if apply_tanh:
        out = jnp.tanh(out)
    out_ref[...] = out.astype(out_ref.dtype)


def _gcn_kernel_resident(adj_ref, x_ref, w_ref, bias_ref, out_ref, acc_ref, *,
                         apply_tanh, agg_dtype):
    """x is resident in VMEM (fetched once per layer); slice blocks with pl.ds."""
    i = pl.program_id(0)
    k = pl.program_id(1)
    row_tile = out_ref.shape[0]
    k_tile = adj_ref.shape[1]
    f_in_pad = x_ref.shape[1]

    @pl.when(k == 0)
    def _():
        # zero the aggregation half; load the self-term row block once per row tile
        acc_ref[:, :f_in_pad] = jnp.zeros((row_tile, f_in_pad), jnp.float32)
        r0 = pl.multiple_of(i * row_tile, row_tile)
        acc_ref[:, f_in_pad:] = x_ref[pl.ds(r0, row_tile), :].astype(jnp.float32)

    # neighbour aggregation in input-feature space: acc[:, :F] += adj[i, k] @ x[k]
    k0 = pl.multiple_of(k * k_tile, k_tile)
    xk = x_ref[pl.ds(k0, k_tile), :].astype(agg_dtype)
    acc_ref[:, :f_in_pad] += jnp.dot(adj_ref[...], xk,
                                     preferred_element_type=jnp.float32)

    @pl.when(k == pl.num_programs(1) - 1)
    def _():
        _finalize(acc_ref, w_ref, bias_ref, out_ref, apply_tanh)


def _gcn_kernel_streamed(adj_ref, xk_ref, xi_ref, w_ref, bias_ref, out_ref, acc_ref, *,
                         apply_tanh, agg_dtype):
    """Fallback for graphs whose x does not fit VMEM: x tiles streamed by BlockSpecs."""
    k = pl.program_id(1)
    row_tile = out_ref.shape[0]
    f_in_pad = xk_ref.shape[1]

    @pl.when(k == 0)
    def _():
        acc_ref[:, :f_in_pad] = jnp.zeros((row_tile, f_in_pad), jnp.float32)
        acc_ref[:, f_in_pad:] = xi_ref[...].astype(jnp.float32)

    acc_ref[:, :f_in_pad] += jnp.dot(adj_ref[...], xk_ref[...].astype(agg_dtype),
                                     preferred_element_type=jnp.float32)

    @pl.when(k == pl.num_programs(1) - 1)
    def _():
        _finalize(acc_ref, w_ref, bias_ref, out_ref, apply_tanh)


# ---------------------------------------------------------------------------
# Layer wrapper
# ---------------------------------------------------------------------------
def gcn_layer(x_p, adj_p, w_stacked_p, bias_p, *, apply_tanh, row_tile, k_tile,
              x_resident, vmem_limit_bytes):
    """One ImpGraphConvolution layer on padded operands.

    x_p:         [N_pad, F_in_pad]  (float32)
    adj_p:       [N_pad, N_pad]     (bf16 or f32)
    w_stacked_p: [2*F_in_pad, F_out_pad]  == concat([W_nbr, W_own], axis=0)
    bias_p:      [1, F_out_pad]
    Returns      [N_pad, F_out_pad] (float32).
    """
    n_pad, f_in_pad = x_p.shape
    f_out_pad = w_stacked_p.shape[1]
    assert n_pad % row_tile == 0 and n_pad % k_tile == 0
    assert w_stacked_p.shape[0] == 2 * f_in_pad

    agg_dtype = adj_p.dtype
    grid = (n_pad // row_tile, n_pad // k_tile)

    # Advisory cost estimate for XLA's scheduler around the per-layer custom call.
    flops = int(2 * n_pad * n_pad * f_in_pad           # aggregation adj @ x
                + 2 * n_pad * (2 * f_in_pad) * f_out_pad)  # fused epilogue matmul
    transcendentals = int(n_pad * f_out_pad) if apply_tanh else 0
    bytes_accessed = int(adj_p.size * jnp.dtype(adj_p.dtype).itemsize
                         + x_p.size * 4
                         + w_stacked_p.size * 4 + bias_p.size * 4
                         + n_pad * f_out_pad * 4)
    cost = pl.CostEstimate(flops=flops, transcendentals=transcendentals,
                           bytes_accessed=bytes_accessed)

    adj_spec = pl.BlockSpec((row_tile, k_tile), lambda i, k: (i, k))
    w_spec = pl.BlockSpec((2 * f_in_pad, f_out_pad), lambda i, k: (0, 0))
    b_spec = pl.BlockSpec((1, f_out_pad), lambda i, k: (0, 0))
    out_spec = pl.BlockSpec((row_tile, f_out_pad), lambda i, k: (i, 0))
    scratch = [pltpu.VMEM((row_tile, 2 * f_in_pad), jnp.float32)]

    if x_resident:
        kernel = functools.partial(_gcn_kernel_resident,
                                   apply_tanh=apply_tanh, agg_dtype=agg_dtype)
        in_specs = [adj_spec,
                    pl.BlockSpec((n_pad, f_in_pad), lambda i, k: (0, 0)),  # resident x
                    w_spec, b_spec]
        args = (adj_p, x_p, w_stacked_p, bias_p)
    else:
        kernel = functools.partial(_gcn_kernel_streamed,
                                   apply_tanh=apply_tanh, agg_dtype=agg_dtype)
        in_specs = [adj_spec,
                    pl.BlockSpec((k_tile, f_in_pad), lambda i, k: (k, 0)),   # x K-block
                    pl.BlockSpec((row_tile, f_in_pad), lambda i, k: (i, 0)),  # x row block
                    w_spec, b_spec]
        args = (adj_p, x_p, x_p, w_stacked_p, bias_p)

    return pl.pallas_call(
        kernel,
        out_shape=jax.ShapeDtypeStruct((n_pad, f_out_pad), jnp.float32),
        grid_spec=pltpu.PrefetchScalarGridSpec(
            num_scalar_prefetch=0,
            grid=grid,
            in_specs=in_specs,
            out_specs=out_spec,
            scratch_shapes=scratch),
        compiler_params=pltpu.CompilerParams(
            dimension_semantics=("parallel", "arbitrary"),
            vmem_limit_bytes=vmem_limit_bytes),
        cost_estimate=cost,
    )(*args)


# ---------------------------------------------------------------------------
# Padding / tiling helpers + ImprovedGCN forward
# ---------------------------------------------------------------------------
_VMEM_BUDGET = 40 * 1024 * 1024   # conservative: fits v7x (64 MiB/TC) with headroom


def _round_up(v, m):
    return (v + m - 1) // m * m


def _pad2d(a, rows, cols):
    return jnp.pad(a, ((0, rows - a.shape[0]), (0, cols - a.shape[1])))


def _choose_tiles(n):
    """Return (n_pad, row_tile, k_tile).

    row_tile and k_tile are decoupled: k_tile (contiguous adj DMA run) is pushed as
    large as the padded N allows; row_tile stays 128/256 so multiple row tiles exist
    for megacore ("parallel") sharding on v7x.
    """
    if n <= 128:
        return 128, 128, 128
    if n <= 256:
        return 256, 128, 256
    n_pad = _round_up(n, 256)
    row_tile = 256
    k_tile = 256
    for cand in (1024, 512):
        if n_pad % cand == 0:
            k_tile = cand
            break
    return n_pad, row_tile, k_tile


def _vmem_estimate(n_pad, f_in_pad, f_out_pad, row_tile, k_tile, adj_itemsize,
                   x_resident):
    adj = 2 * row_tile * k_tile * adj_itemsize                 # double-buffered adj tile
    if x_resident:
        x = 2 * n_pad * f_in_pad * 4                           # resident x
    else:
        x = 2 * (k_tile + row_tile) * f_in_pad * 4             # streamed x blocks
    w = 2 * (2 * f_in_pad) * f_out_pad * 4                     # stacked weight
    b = 2 * 8 * f_out_pad * 4                                  # bias (sublane-padded)
    out = 2 * row_tile * f_out_pad * 4
    acc = row_tile * 2 * f_in_pad * 4
    return adj + x + w + b + out + acc


def improved_gcn_forward(params, x, adj, *, adj_dtype=jnp.bfloat16):
    """ImprovedGCN forward (eval mode: dropout = identity; layer_norm=False).

    adj_dtype=jnp.bfloat16 halves the dominant HBM stream (the dense N^2 adjacency)
    and runs the aggregation matmul at the MXU-native bf16 rate (f32 accumulation);
    pass jnp.float32 for exact f32 semantics.
    """
    # TODO(synk): dropout (training mode) and the optional LayerNorm are not
    # implemented in-kernel; the forward here is eval mode with layer_norm=False.
    n, f_in = x.shape
    n_pad, row_tile, k_tile = _choose_tiles(n)
    f_in_pad = _round_up(f_in, 128)
    adj_itemsize = jnp.dtype(adj_dtype).itemsize

    # Pad once; intermediate activations stay padded (lane-dense) between layers.
    x_p = _pad2d(x.astype(jnp.float32), n_pad, f_in_pad)
    adj_p = _pad2d(adj, n_pad, n_pad).astype(adj_dtype)

    n_layers = len(params)
    for idx, p in enumerate(params):
        f_out = p["bias"].shape[0]
        f_out_pad = _round_up(f_out, 128)
        cur_f_in_pad = x_p.shape[1]

        # Pre-stack [W_nbr ; W_own] -> one epilogue matmul, one weight DMA stream.
        w_stacked = jnp.concatenate(
            [_pad2d(p["w_nbr"].astype(jnp.float32), cur_f_in_pad, f_out_pad),
             _pad2d(p["w_own"].astype(jnp.float32), cur_f_in_pad, f_out_pad)],
            axis=0)
        bias_p = _pad2d(p["bias"].reshape(1, -1).astype(jnp.float32), 1, f_out_pad)

        # Keep x resident in VMEM if the total footprint stays under the v7x-safe
        # budget; otherwise stream per-tile x blocks.
        x_resident = _vmem_estimate(n_pad, cur_f_in_pad, f_out_pad, row_tile, k_tile,
                                    adj_itemsize, True) <= _VMEM_BUDGET
        est = _vmem_estimate(n_pad, cur_f_in_pad, f_out_pad, row_tile, k_tile,
                             adj_itemsize, x_resident)
        vmem_limit = int(min(max(2 * est, 16 * 1024 * 1024), 48 * 1024 * 1024))

        x_p = gcn_layer(x_p, adj_p, w_stacked, bias_p,
                        apply_tanh=(idx != n_layers - 1),
                        row_tile=row_tile, k_tile=k_tile,
                        x_resident=x_resident, vmem_limit_bytes=vmem_limit)

    f_out_last = params[-1]["bias"].shape[0]
    return x_p[:n, :f_out_last]


# ---------------------------------------------------------------------------
# Parameter init (matches nn.init.xavier_uniform_(gain=2.0) / zeros_ semantics)
# ---------------------------------------------------------------------------
def xavier_uniform(key, fan_in, fan_out, gain):
    bound = gain * jnp.sqrt(6.0 / (fan_in + fan_out))
    return jax.random.uniform(key, (fan_in, fan_out), jnp.float32,
                              minval=-bound, maxval=bound)


def init_improved_gcn(key, input_dim, hidden_dims, output_dim):
    layer_dims = list(hidden_dims) + [output_dim]
    in_dims = [input_dim] + layer_dims[:-1]
    params = []
    for fin, fout in zip(in_dims, layer_dims):
        key, k_own, k_nbr = jax.random.split(key, 3)
        params.append(dict(
            w_own=xavier_uniform(k_own, fin, fout, gain=2.0),
            w_nbr=xavier_uniform(k_nbr, fin, fout, gain=2.0),
            bias=jnp.zeros((fout,), jnp.float32),
        ))
    return params


# ---------------------------------------------------------------------------
# Pure-JAX references
# ---------------------------------------------------------------------------
def improved_gcn_ref(params, x, adj):
    """Exact f32 reference (matches the PyTorch forward in eval mode)."""
    n_layers = len(params)
    for idx, p in enumerate(params):
        x = adj @ (x @ p["w_nbr"]) + x @ p["w_own"] + p["bias"]
        if idx != n_layers - 1:
            x = jnp.tanh(x)
    return x


def improved_gcn_matched_ref(params, x, adj):
    """Reference matching the kernel's bf16-adjacency numerics: adjacency and the
    aggregated x operand rounded through bf16, f32 accumulation and epilogue."""
    adj_q = adj.astype(jnp.bfloat16).astype(jnp.float32)
    n_layers = len(params)
    for idx, p in enumerate(params):
        x_q = x.astype(jnp.bfloat16).astype(jnp.float32)
        x = (adj_q @ x_q) @ p["w_nbr"] + x @ p["w_own"] + p["bias"]
        if idx != n_layers - 1:
            x = jnp.tanh(x)
    return x


# ---------------------------------------------------------------------------
# Demo / self-test
# ---------------------------------------------------------------------------
def _make_graph(key, n, f_in, density):
    k_x, k_adj = jax.random.split(key)
    x = jax.random.normal(k_x, (n, f_in), jnp.float32)
    # Symmetric, zero-diagonal, degree-normalized dense adjacency (normalize_adj).
    a = (jax.random.uniform(k_adj, (n, n)) < density).astype(jnp.float32)
    a = jnp.maximum(a, a.T)
    a = a * (1.0 - jnp.eye(n, dtype=jnp.float32))
    deg = a.sum(axis=1)
    d_inv_sqrt = 1.0 / jnp.sqrt(jnp.maximum(deg, 1.0))
    adj = a * d_inv_sqrt[:, None] * d_inv_sqrt[None, :]
    return x, adj


if __name__ == "__main__":
    key = jax.random.PRNGKey(0)
    k1, k2, kp1, kp2 = jax.random.split(key, 4)

    fwd = jax.jit(improved_gcn_forward, static_argnames=("adj_dtype",))

    # --- Case 1: tiny graph, single-block grid, exact f32 semantics ------------
    N1, IN1, HID1, OUT1 = 64, 32, [32], 16
    x1, adj1 = _make_graph(k1, N1, IN1, density=0.2)
    params1 = init_improved_gcn(kp1, IN1, HID1, OUT1)

    out1 = jax.block_until_ready(fwd(params1, x1, adj1, adj_dtype=jnp.float32))
    ref1 = improved_gcn_ref(params1, x1, adj1)
    assert out1.shape == (N1, OUT1)
    assert jnp.allclose(out1, ref1, atol=1e-4, rtol=1e-4), "f32 kernel mismatch (case 1)"

    # --- Case 2: multi-tile grid (rows x K), resident x, 3 layers --------------
    N2, IN2, HID2, OUT2 = 640, 96, [128, 64], 16
    x2, adj2 = _make_graph(k2, N2, IN2, density=0.05)
    params2 = init_improved_gcn(kp2, IN2, HID2, OUT2)

    # 2a: exact f32 semantics on the multi-tile path
    out2_f32 = jax.block_until_ready(fwd(params2, x2, adj2, adj_dtype=jnp.float32))
    ref2_f32 = improved_gcn_ref(params2, x2, adj2)
    assert out2_f32.shape == (N2, OUT2)
    assert jnp.allclose(out2_f32, ref2_f32, atol=1e-3, rtol=1e-3), \
        "f32 kernel mismatch (case 2)"

    # 2b: default bf16 adjacency (perf mode) vs numerics-matched reference
    out2_bf16 = jax.block_until_ready(fwd(params2, x2, adj2))
    ref2_matched = improved_gcn_matched_ref(params2, x2, adj2)
    assert out2_bf16.shape == (N2, OUT2)
    assert jnp.allclose(out2_bf16, ref2_matched, atol=2e-3, rtol=2e-3), \
        "bf16-adjacency kernel mismatch vs matched reference (case 2)"

    print("KERNEL_OK")
</pallas_src>

<mosaic_0001>
module attributes {stable_mosaic.version = 11 : i64} {
  func.func @_gcn_kernel_resident(%arg0: i32, %arg1: i32, %arg2: memref<128x128xf32, #tpu.memory_space<vmem>>, %arg3: memref<128x128xf32, #tpu.memory_space<vmem>>, %arg4: memref<256x128xf32, #tpu.memory_space<vmem>>, %arg5: memref<1x128xf32, #tpu.memory_space<vmem>>, %arg6: memref<128x128xf32, #tpu.memory_space<vmem>>, %arg7: memref<128x256xf32, #tpu.memory_space<vmem>>) attributes {dimension_semantics = [#tpu.dimension_semantics<parallel>, #tpu.dimension_semantics<arbitrary>], iteration_bounds = array<i64: 1, 1>, scalar_prefetch = 0 : i64, scratch_operands = 1 : i64, tpu.core_type = #tpu.core_type<tc>, window_params = [{transform_indices = @transform_0, window_bounds = array<i64: 128, 128>}, {pipeline_mode = #tpu.pipeline_mode<synchronous>, transform_indices = @transform_1, window_bounds = array<i64: 128, 128>}, {pipeline_mode = #tpu.pipeline_mode<synchronous>, transform_indices = @transform_2, window_bounds = array<i64: 256, 128>}, {pipeline_mode = #tpu.pipeline_mode<synchronous>, transform_indices = @transform_3, window_bounds = array<i64: 1, 128>}, {transform_indices = @transform_4, window_bounds = array<i64: 128, 128>}]} {
    %c0_i32 = arith.constant 0 : i32
    %0 = arith.cmpi eq, %arg1, %c0_i32 : i32
    %1 = arith.extui %0 : i1 to i32
    %c0_i32_0 = arith.constant 0 : i32
    %2 = arith.cmpi ne, %1, %c0_i32_0 : i32
    scf.if %2 {
      %cst_9 = arith.constant 0.000000e+00 : f32
      %15 = vector.broadcast %cst_9 : f32 to vector<128x128xf32>
      %c0_10 = arith.constant 0 : index
      %c0_11 = arith.constant 0 : index
      %16 = vector.load %arg7[%c0_10, %c0_11] : memref<128x256xf32, #tpu.memory_space<vmem>>, vector<128x128xf32>
      tpu.vector_store %arg7[%c0_10, %c0_11], %15 {strides = array<i32>} : memref<128x256xf32, #tpu.memory_space<vmem>>, vector<128x128xf32>,
      %c128_i32_12 = arith.constant 128 : i32
      %17 = arith.muli %arg0, %c128_i32_12 : i32
      %18 = tpu.assume_multiple %17, 128 : i32
      %19 = arith.index_cast %18 : i32 to index
      %c0_13 = arith.constant 0 : index
      %20 = vector.load %arg3[%19, %c0_13] : memref<128x128xf32, #tpu.memory_space<vmem>>, vector<128x128xf32>
      %c0_14 = arith.constant 0 : index
      %c128 = arith.constant 128 : index
      %21 = vector.load %arg7[%c0_14, %c128] : memref<128x256xf32, #tpu.memory_space<vmem>>, vector<128x128xf32>
      tpu.vector_store %arg7[%c0_14, %c128], %20 {strides = array<i32>} : memref<128x256xf32, #tpu.memory_space<vmem>>, vector<128x128xf32>,
    } else {
    }
    %c128_i32 = arith.constant 128 : i32
    %3 = arith.muli %arg1, %c128_i32 : i32
    %4 = tpu.assume_multiple %3, 128 : i32
    %5 = arith.index_cast %4 : i32 to index
    %c0 = arith.constant 0 : index
    %6 = vector.load %arg3[%5, %c0] : memref<128x128xf32, #tpu.memory_space<vmem>>, vector<128x128xf32>
    %c0_1 = arith.constant 0 : index
    %c0_2 = arith.constant 0 : index
    %7 = vector.load %arg7[%c0_1, %c0_2] : memref<128x256xf32, #tpu.memory_space<vmem>>, vector<128x128xf32>
    %c0_3 = arith.constant 0 : index
    %c0_4 = arith.constant 0 : index
    %8 = vector.load %arg2[%c0_3, %c0_4] : memref<128x128xf32, #tpu.memory_space<vmem>>, vector<128x128xf32>
    %cst = arith.constant dense<0.000000e+00> : vector<128x128xf32>
    %9 = tpu.matmul %8, %6, %cst {dimension_numbers = #tpu.dot_dimension_numbers<[1], [0], [0], [1], [0, 0, 1, 1], [], []>} : vector<128x128xf32>, vector<128x128xf32>, vector<128x128xf32> -> vector<128x128xf32>
    %10 = arith.addf %7, %9 : vector<128x128xf32>
    %c0_5 = arith.constant 0 : index
    %c0_6 = arith.constant 0 : index
    %11 = vector.load %arg7[%c0_5, %c0_6] : memref<128x256xf32, #tpu.memory_space<vmem>>, vector<128x128xf32>
    tpu.vector_store %arg7[%c0_5, %c0_6], %10 {strides = array<i32>} : memref<128x256xf32, #tpu.memory_space<vmem>>, vector<128x128xf32>,
    %c0_i32_7 = arith.constant 0 : i32
    %12 = arith.cmpi eq, %arg1, %c0_i32_7 : i32
    %13 = arith.extui %12 : i1 to i32
    %c0_i32_8 = arith.constant 0 : i32
    %14 = arith.cmpi ne, %13, %c0_i32_8 : i32
    scf.if %14 {
      %c0_9 = arith.constant 0 : index
      %c0_10 = arith.constant 0 : index
      %15 = vector.load %arg7[%c0_9, %c0_10] : memref<128x256xf32, #tpu.memory_space<vmem>>, vector<128x256xf32>
      %c0_11 = arith.constant 0 : index
      %c0_12 = arith.constant 0 : index
      %16 = vector.load %arg4[%c0_11, %c0_12] : memref<256x128xf32, #tpu.memory_space<vmem>>, vector<256x128xf32>
      %cst_13 = arith.constant dense<0.000000e+00> : vector<128x128xf32>
      %17 = tpu.matmul %15, %16, %cst_13 {dimension_numbers = #tpu.dot_dimension_numbers<[1], [0], [0], [1], [0, 0, 1, 1], [], []>} : vector<128x256xf32>, vector<256x128xf32>, vector<128x128xf32> -> vector<128x128xf32>
      %c0_14 = arith.constant 0 : index
      %c0_15 = arith.constant 0 : index
      %18 = vector.load %arg5[%c0_14, %c0_15] : memref<1x128xf32, #tpu.memory_space<vmem>>, vector<1x128xf32>
      %19 = vector.broadcast %18 : vector<1x128xf32> to vector<128x128xf32>
      %20 = arith.addf %17, %19 : vector<128x128xf32>
      %21 = math.tanh %20 : vector<128x128xf32>
      %c0_16 = arith.constant 0 : index
      %c0_17 = arith.constant 0 : index
      %22 = vector.load %arg6[%c0_16, %c0_17] : memref<128x128xf32, #tpu.memory_space<vmem>>, vector<128x128xf32>
      tpu.vector_store %arg6[%c0_16, %c0_17], %21 {strides = array<i32>} : memref<128x128xf32, #tpu.memory_space<vmem>>, vector<128x128xf32>,
    } else {
    }
    return
  }
  func.func @transform_0(%arg0: i32, %arg1: i32) -> (i32, i32) {
    %c0_i32 = arith.constant 0 : i32
    return %arg0, %arg1 : i32, i32
  }
  func.func @transform_1(%arg0: i32, %arg1: i32) -> (i32, i32) {
    %c0_i32 = arith.constant 0 : i32
    %c0_i32_0 = arith.constant 0 : i32
    %c0_i32_1 = arith.constant 0 : i32
    return %c0_i32, %c0_i32_0 : i32, i32
  }
  func.func @transform_2(%arg0: i32, %arg1: i32) -> (i32, i32) {
    %c0_i32 = arith.constant 0 : i32
    %c0_i32_0 = arith.constant 0 : i32
    %c0_i32_1 = arith.constant 0 : i32
    return %c0_i32, %c0_i32_0 : i32, i32
  }
  func.func @transform_3(%arg0: i32, %arg1: i32) -> (i32, i32) {
    %c0_i32 = arith.constant 0 : i32
    %c0_i32_0 = arith.constant 0 : i32
    %c0_i32_1 = arith.constant 0 : i32
    return %c0_i32, %c0_i32_0 : i32, i32
  }
  func.func @transform_4(%arg0: i32, %arg1: i32) -> (i32, i32) {
    %c0_i32 = arith.constant 0 : i32
    %c0_i32_0 = arith.constant 0 : i32
    return %arg0, %c0_i32 : i32, i32
  }
}

module attributes {stable_mosaic.version = 11 : i64} {
  func.func @_gcn_kernel_resident(%arg0: i32, %arg1: i32, %arg2: memref<128x128xf32, #tpu.memory_space<vmem>>, %arg3: memref<128x128xf32, #tpu.memory_space<vmem>>, %arg4: memref<256x128xf32, #tpu.memory_space<vmem>>, %arg5: memref<1x128xf32, #tpu.memory_space<vmem>>, %arg6: memref<128x128xf32, #tpu.memory_space<vmem>>, %arg7: memref<128x256xf32, #tpu.memory_space<vmem>>) attributes {dimension_semantics = [#tpu.dimension_semantics<parallel>, #tpu.dimension_semantics<arbitrary>], iteration_bounds = array<i64: 1, 1>, scalar_prefetch = 0 : i64, scratch_operands = 1 : i64, tpu.core_type = #tpu.core_type<tc>, window_params = [{transform_indices = @transform_0, window_bounds = array<i64: 128, 128>}, {pipeline_mode = #tpu.pipeline_mode<synchronous>, transform_indices = @transform_1, window_bounds = array<i64: 128, 128>}, {pipeline_mode = #tpu.pipeline_mode<synchronous>, transform_indices = @transform_2, window_bounds = array<i64: 256, 128>}, {pipeline_mode = #tpu.pipeline_mode<synchronous>, transform_indices = @transform_3, window_bounds = array<i64: 1, 128>}, {transform_indices = @transform_4, window_bounds = array<i64: 128, 128>}]} {
    %c0_i32 = arith.constant 0 : i32
    %0 = arith.cmpi eq, %arg1, %c0_i32 : i32
    %1 = arith.extui %0 : i1 to i32
    %c0_i32_0 = arith.constant 0 : i32
    %2 = arith.cmpi ne, %1, %c0_i32_0 : i32
    scf.if %2 {
      %cst_9 = arith.constant 0.000000e+00 : f32
      %15 = vector.broadcast %cst_9 : f32 to vector<128x128xf32>
      %c0_10 = arith.constant 0 : index
      %c0_11 = arith.constant 0 : index
      %16 = vector.load %arg7[%c0_10, %c0_11] : memref<128x256xf32, #tpu.memory_space<vmem>>, vector<128x128xf32>
      tpu.vector_store %arg7[%c0_10, %c0_11], %15 {strides = array<i32>} : memref<128x256xf32, #tpu.memory_space<vmem>>, vector<128x128xf32>,
      %c128_i32_12 = arith.constant 128 : i32
      %17 = arith.muli %arg0, %c128_i32_12 : i32
      %18 = tpu.assume_multiple %17, 128 : i32
      %19 = arith.index_cast %18 : i32 to index
      %c0_13 = arith.constant 0 : index
      %20 = vector.load %arg3[%19, %c0_13] : memref<128x128xf32, #tpu.memory_space<vmem>>, vector<128x128xf32>
      %c0_14 = arith.constant 0 : index
      %c128 = arith.constant 128 : index
      %21 = vector.load %arg7[%c0_14, %c128] : memref<128x256xf32, #tpu.memory_space<vmem>>, vector<128x128xf32>
      tpu.vector_store %arg7[%c0_14, %c128], %20 {strides = array<i32>} : memref<128x256xf32, #tpu.memory_space<vmem>>, vector<128x128xf32>,
    } else {
    }
    %c128_i32 = arith.constant 128 : i32
    %3 = arith.muli %arg1, %c128_i32 : i32
    %4 = tpu.assume_multiple %3, 128 : i32
    %5 = arith.index_cast %4 : i32 to index
    %c0 = arith.constant 0 : index
    %6 = vector.load %arg3[%5, %c0] : memref<128x128xf32, #tpu.memory_space<vmem>>, vector<128x128xf32>
    %c0_1 = arith.constant 0 : index
    %c0_2 = arith.constant 0 : index
    %7 = vector.load %arg7[%c0_1, %c0_2] : memref<128x256xf32, #tpu.memory_space<vmem>>, vector<128x128xf32>
    %c0_3 = arith.constant 0 : index
    %c0_4 = arith.constant 0 : index
    %8 = vector.load %arg2[%c0_3, %c0_4] : memref<128x128xf32, #tpu.memory_space<vmem>>, vector<128x128xf32>
    %cst = arith.constant dense<0.000000e+00> : vector<128x128xf32>
    %9 = tpu.matmul %8, %6, %cst {dimension_numbers = #tpu.dot_dimension_numbers<[1], [0], [0], [1], [0, 0, 1, 1], [], []>} : vector<128x128xf32>, vector<128x128xf32>, vector<128x128xf32> -> vector<128x128xf32>
    %10 = arith.addf %7, %9 : vector<128x128xf32>
    %c0_5 = arith.constant 0 : index
    %c0_6 = arith.constant 0 : index
    %11 = vector.load %arg7[%c0_5, %c0_6] : memref<128x256xf32, #tpu.memory_space<vmem>>, vector<128x128xf32>
    tpu.vector_store %arg7[%c0_5, %c0_6], %10 {strides = array<i32>} : memref<128x256xf32, #tpu.memory_space<vmem>>, vector<128x128xf32>,
    %c0_i32_7 = arith.constant 0 : i32
    %12 = arith.cmpi eq, %arg1, %c0_i32_7 : i32
    %13 = arith.extui %12 : i1 to i32
    %c0_i32_8 = arith.constant 0 : i32
    %14 = arith.cmpi ne, %13, %c0_i32_8 : i32
    scf.if %14 {
      %c0_9 = arith.constant 0 : index
      %c0_10 = arith.constant 0 : index
      %15 = vector.load %arg7[%c0_9, %c0_10] : memref<128x256xf32, #tpu.memory_space<vmem>>, vector<128x256xf32>
      %c0_11 = arith.constant 0 : index
      %c0_12 = arith.constant 0 : index
      %16 = vector.load %arg4[%c0_11, %c0_12] : memref<256x128xf32, #tpu.memory_space<vmem>>, vector<256x128xf32>
      %cst_13 = arith.constant dense<0.000000e+00> : vector<128x128xf32>
      %17 = tpu.matmul %15, %16, %cst_13 {dimension_numbers = #tpu.dot_dimension_numbers<[1], [0], [0], [1], [0, 0, 1, 1], [], []>} : vector<128x256xf32>, vector<256x128xf32>, vector<128x128xf32> -> vector<128x128xf32>
      %c0_14 = arith.constant 0 : index
      %c0_15 = arith.constant 0 : index
      %18 = vector.load %arg5[%c0_14, %c0_15] : memref<1x128xf32, #tpu.memory_space<vmem>>, vector<1x128xf32>
      %19 = vector.broadcast %18 : vector<1x128xf32> to vector<128x128xf32>
      %20 = arith.addf %17, %19 : vector<128x128xf32>
      %c0_16 = arith.constant 0 : index
      %c0_17 = arith.constant 0 : index
      %21 = vector.load %arg6[%c0_16, %c0_17] : memref<128x128xf32, #tpu.memory_space<vmem>>, vector<128x128xf32>
      tpu.vector_store %arg6[%c0_16, %c0_17], %20 {strides = array<i32>} : memref<128x128xf32, #tpu.memory_space<vmem>>, vector<128x128xf32>,
    } else {
    }
    return
  }
  func.func @transform_0(%arg0: i32, %arg1: i32) -> (i32, i32) {
    %c0_i32 = arith.constant 0 : i32
    return %arg0, %arg1 : i32, i32
  }
  func.func @transform_1(%arg0: i32, %arg1: i32) -> (i32, i32) {
    %c0_i32 = arith.constant 0 : i32
    %c0_i32_0 = arith.constant 0 : i32
    %c0_i32_1 = arith.constant 0 : i32
    return %c0_i32, %c0_i32_0 : i32, i32
  }
  func.func @transform_2(%arg0: i32, %arg1: i32) -> (i32, i32) {
    %c0_i32 = arith.constant 0 : i32
    %c0_i32_0 = arith.constant 0 : i32
    %c0_i32_1 = arith.constant 0 : i32
    return %c0_i32, %c0_i32_0 : i32, i32
  }
  func.func @transform_3(%arg0: i32, %arg1: i32) -> (i32, i32) {
    %c0_i32 = arith.constant 0 : i32
    %c0_i32_0 = arith.constant 0 : i32
    %c0_i32_1 = arith.constant 0 : i32
    return %c0_i32, %c0_i32_0 : i32, i32
  }
  func.func @transform_4(%arg0: i32, %arg1: i32) -> (i32, i32) {
    %c0_i32 = arith.constant 0 : i32
    %c0_i32_0 = arith.constant 0 : i32
    return %arg0, %c0_i32 : i32, i32
  }
}

</mosaic_0001>

<llo_original>
// kernel: improved_gcn_forward.3
$region0: #{improved_gcn_forward.3}
  #allocation0 [shape = 'u32[]', space=smem, size = 0x4, offset = 0x4, fixed_abs, tag = 'smem constant byte address 0x4 - core index']
  #allocation1 [shape = 'u32[144,128]{1,0:T(1,128)}', space=vmem, size = 0x12000, scoped, tag = 'internal scratch']
  #allocation2 [shape = 'f32[128,256]{1,0:T(8,128)}', space=vmem, size = 0x20000, scoped, tag = 'scratch operand']
  %s0 = inlined_call_operand.vmem [shape: f32[128,128], index: 0, kind: input, shape index: {}]
  %s1 = inlined_call_operand.vmem [shape: f32[128,128], index: 1, kind: input, shape index: {}]
  %s2 = inlined_call_operand.vmem [shape: f32[256,128], index: 2, kind: input, shape index: {}]
  %s3 = inlined_call_operand.vmem [shape: f32[1,128], index: 3, kind: input, shape index: {}]
  %s4 = inlined_call_operand.vmem [shape: f32[128,128], index: 4, kind: output, shape index: {}]
  %s5 = sld [smem:[#allocation0]]
  $region34: #{improved_gcn_forward.3} parent=0
    _
  %s7 = ssub.s32 1, %s5
  %s8 = scalar_select 0, %s7, %s5
  // Predicated region
  $region2: #{improved_gcn_forward.3} parent=0 // pred_check
    _
  $region3: #{improved_gcn_forward.3} parent=0 // pred_check_branch
    %10 = sbr.rel (0) target = $region5
  $region4: #{improved_gcn_forward.3} parent=0 // pred_region
    _
  $region5: #{improved_gcn_forward.3} parent=0 // pred_fallthru
    _
  // Predicated region
  $region6: #{improved_gcn_forward.3} parent=0 // pred_check
    _
  $region7: #{improved_gcn_forward.3} parent=0 // pred_check_branch
    %12 = sbr.rel (0) target = $region9
  $region8: #{improved_gcn_forward.3} parent=0 // pred_region
    _
  $region9: #{improved_gcn_forward.3} parent=0 // pred_fallthru
    _
  // Predicated region
  $region10: #{improved_gcn_forward.3} parent=0 // pred_check
    _
  $region11: #{improved_gcn_forward.3} parent=0 // pred_check_branch
    %14 = sbr.rel (0) target = $region13
  $region12: #{improved_gcn_forward.3} parent=0 // pred_region
    _
  $region13: #{improved_gcn_forward.3} parent=0 // pred_fallthru
    _
  // Predicated region
  $region14: #{improved_gcn_forward.3} parent=0 // pred_check
    _
  $region15: #{improved_gcn_forward.3} parent=0 // pred_check_branch
    %16 = sbr.rel (0) target = $region17
  $region16: #{improved_gcn_forward.3} parent=0 // pred_region
    _
  $region17: #{improved_gcn_forward.3} parent=0 // pred_fallthru
    _
  %p17 = scmp.eq.s32.totalorder 0, 0
  // Predicated region
  $region18: #{improved_gcn_forward.3} parent=0 // pred_check
    %p18 = pneg %p17
  $region19: #{improved_gcn_forward.3} parent=0 // pred_check_branch
    %20 = sbr.rel (%p18) target = $region21
  $region20: #{improved_gcn_forward.3} parent=0 // pred_region
    %21 = vst [vmem:[#allocation2] sm:$0xff] 0.0
    %22 = vst [vmem:[#allocation2 + $0x10] sm:$0xff] 0.0
    %23 = vst [vmem:[#allocation2 + $0x20] sm:$0xff] 0.0
    %24 = vst [vmem:[#allocation2 + $0x30] sm:$0xff] 0.0
    %25 = vst [vmem:[#allocation2 + $0x40] sm:$0xff] 0.0
    %26 = vst [vmem:[#allocation2 + $0x50] sm:$0xff] 0.0
    %27 = vst [vmem:[#allocation2 + $0x60] sm:$0xff] 0.0
    %28 = vst [vmem:[#allocation2 + $0x70] sm:$0xff] 0.0
    %29 = vst [vmem:[#allocation2 + $0x80] sm:$0xff] 0.0
    %30 = vst [vmem:[#allocation2 + $0x90] sm:$0xff] 0.0
    %31 = vst [vmem:[#allocation2 + $0xa0] sm:$0xff] 0.0
    %32 = vst [vmem:[#allocation2 + $0xb0] sm:$0xff] 0.0
    %33 = vst [vmem:[#allocation2 + $0xc0] sm:$0xff] 0.0
    %34 = vst [vmem:[#allocation2 + $0xd0] sm:$0xff] 0.0
    %35 = vst [vmem:[#allocation2 + $0xe0] sm:$0xff] 0.0
    %36 = vst [vmem:[#allocation2 + $0xf0] sm:$0xff] 0.0
    %s37 = smul.u32 0, 128
    %s38 = scalar_lea.vmem %s1, %s37
    %v39 = vld [vmem:[%s38] sm:$0xff]
    %v40 = vld [vmem:[%s38 + $0x8] sm:$0xff]
    %v41 = vld [vmem:[%s38 + $0x10] sm:$0xff]
    %v42 = vld [vmem:[%s38 + $0x18] sm:$0xff]
    %v43 = vld [vmem:[%s38 + $0x20] sm:$0xff]
    %v44 = vld [vmem:[%s38 + $0x28] sm:$0xff]
    %v45 = vld [vmem:[%s38 + $0x30] sm:$0xff]
    %v46 = vld [vmem:[%s38 + $0x38] sm:$0xff]
    %v47 = vld [vmem:[%s38 + $0x40] sm:$0xff]
    %v48 = vld [vmem:[%s38 + $0x48] sm:$0xff]
    %v49 = vld [vmem:[%s38 + $0x50] sm:$0xff]
    %v50 = vld [vmem:[%s38 + $0x58] sm:$0xff]
    %v51 = vld [vmem:[%s38 + $0x60] sm:$0xff]
    %v52 = vld [vmem:[%s38 + $0x68] sm:$0xff]
    %v53 = vld [vmem:[%s38 + $0x70] sm:$0xff]
    %v54 = vld [vmem:[%s38 + $0x78] sm:$0xff]
    %55 = vst [vmem:[#allocation2 + $0x8] sm:$0xff] %v39
    %56 = vst [vmem:[#allocation2 + $0x18] sm:$0xff] %v40
    %57 = vst [vmem:[#allocation2 + $0x28] sm:$0xff] %v41
    %58 = vst [vmem:[#allocation2 + $0x38] sm:$0xff] %v42
    %59 = vst [vmem:[#allocation2 + $0x48] sm:$0xff] %v43
    %60 = vst [vmem:[#allocation2 + $0x58] sm:$0xff] %v44
    %61 = vst [vmem:[#allocation2 + $0x68] sm:$0xff] %v45
    %62 = vst [vmem:[#allocation2 + $0x78] sm:$0xff] %v46
    %63 = vst [vmem:[#allocation2 + $0x88] sm:$0xff] %v47
    %64 = vst [vmem:[#allocation2 + $0x98] sm:$0xff] %v48
    %65 = vst [vmem:[#allocation2 + $0xa8] sm:$0xff] %v49
    %66 = vst [vmem:[#allocation2 + $0xb8] sm:$0xff] %v50
    %67 = vst [vmem:[#allocation2 + $0xc8] sm:$0xff] %v51
    %68 = vst [vmem:[#allocation2 + $0xd8] sm:$0xff] %v52
    %69 = vst [vmem:[#allocation2 + $0xe8] sm:$0xff] %v53
    %70 = vst [vmem:[#allocation2 + $0xf8] sm:$0xff] %v54
  $region21: #{improved_gcn_forward.3} parent=0 // pred_fallthru
    _
  %s71 = smul.u32 0, 128
  %s72 = scalar_lea.vmem %s1, %s71
  %v73 = vld [vmem:[%s72] sm:$0xff]
  %v74 = vld [vmem:[%s72 + $0x8] sm:$0xff]
  %v75 = vld [vmem:[%s72 + $0x10] sm:$0xff]
  %v76 = vld [vmem:[%s72 + $0x18] sm:$0xff]
  %v77 = vld [vmem:[%s72 + $0x20] sm:$0xff]
  %v78 = vld [vmem:[%s72 + $0x28] sm:$0xff]
  %v79 = vld [vmem:[%s72 + $0x30] sm:$0xff]
  %v80 = vld [vmem:[%s72 + $0x38] sm:$0xff]
  %v81 = vld [vmem:[%s72 + $0x40] sm:$0xff]
  %v82 = vld [vmem:[%s72 + $0x48] sm:$0xff]
  %v83 = vld [vmem:[%s72 + $0x50] sm:$0xff]
  %v84 = vld [vmem:[%s72 + $0x58] sm:$0xff]
  %v85 = vld [vmem:[%s72 + $0x60] sm:$0xff]
  %v86 = vld [vmem:[%s72 + $0x68] sm:$0xff]
  %v87 = vld [vmem:[%s72 + $0x70] sm:$0xff]
  %v88 = vld [vmem:[%s72 + $0x78] sm:$0xff]
  %v89 = vld [vmem:[#allocation2] sm:$0xff]
  %v90 = vld [vmem:[#allocation2 + $0x10] sm:$0xff]
  %v91 = vld [vmem:[#allocation2 + $0x20] sm:$0xff]
  %v92 = vld [vmem:[#allocation2 + $0x30] sm:$0xff]
  %v93 = vld [vmem:[#allocation2 + $0x40] sm:$0xff]
  %v94 = vld [vmem:[#allocation2 + $0x50] sm:$0xff]
  %v95 = vld [vmem:[#allocation2 + $0x60] sm:$0xff]
  %v96 = vld [vmem:[#allocation2 + $0x70] sm:$0xff]
  %v97 = vld [vmem:[#allocation2 + $0x80] sm:$0xff]
  %v98 = vld [vmem:[#allocation2 + $0x90] sm:$0xff]
  %v99 = vld [vmem:[#allocation2 + $0xa0] sm:$0xff]
  %v100 = vld [vmem:[#allocation2 + $0xb0] sm:$0xff]
  %v101 = vld [vmem:[#allocation2 + $0xc0] sm:$0xff]
  %v102 = vld [vmem:[#allocation2 + $0xd0] sm:$0xff]
  %v103 = vld [vmem:[#allocation2 + $0xe0] sm:$0xff]
  %v104 = vld [vmem:[#allocation2 + $0xf0] sm:$0xff]
  %v105 = vld [vmem:[%s0] sm:$0xff]
  %v106 = vld [vmem:[%s0 + $0x8] sm:$0xff]
  %v107 = vld [vmem:[%s0 + $0x10] sm:$0xff]
  %v108 = vld [vmem:[%s0 + $0x18] sm:$0xff]
  %v109 = vld [vmem:[%s0 + $0x20] sm:$0xff]
  %v110 = vld [vmem:[%s0 + $0x28] sm:$0xff]
  %v111 = vld [vmem:[%s0 + $0x30] sm:$0xff]
  %v112 = vld [vmem:[%s0 + $0x38] sm:$0xff]
  %v113 = vld [vmem:[%s0 + $0x40] sm:$0xff]
  %v114 = vld [vmem:[%s0 + $0x48] sm:$0xff]
  %v115 = vld [vmem:[%s0 + $0x50] sm:$0xff]
  %v116 = vld [vmem:[%s0 + $0x58] sm:$0xff]
  %v117 = vld [vmem:[%s0 + $0x60] sm:$0xff]
  %v118 = vld [vmem:[%s0 + $0x68] sm:$0xff]
  %v119 = vld [vmem:[%s0 + $0x70] sm:$0xff]
  %v120 = vld [vmem:[%s0 + $0x78] sm:$0xff]
  %121 = vmatprep.subr.mxu0 0.0
  %122 = vmatpush1.msra.mxu0 %v73
  %123 = vmatprep.subr.mxu0 0.0
  %124 = vmatpush1.msra.mxu0 %v74
  %125 = vmatprep.subr.mxu0 0.0
  %126 = vmatpush1.msra.mxu0 %v75
  %127 = vmatprep.subr.mxu0 0.0
  %128 = vmatpush1.msra.mxu0 %v76
  %129 = vmatprep.subr.mxu0 0.0
  %130 = vmatpush1.msra.mxu0 %v77
  %131 = vmatprep.subr.mxu0 0.0
  %132 = vmatpush1.msra.mxu0 %v78
  %133 = vmatprep.subr.mxu0 0.0
  %134 = vmatpush1.msra.mxu0 %v79
  %135 = vmatprep.subr.mxu0 0.0
  %136 = vmatpush1.msra.mxu0 %v80
  %137 = vmatprep.subr.mxu0 0.0
  %138 = vmatpush1.msra.mxu0 %v81
  %139 = vmatprep.subr.mxu0 0.0
  %140 = vmatpush1.msra.mxu0 %v82
  %141 = vmatprep.subr.mxu0 0.0
  %142 = vmatpush1.msra.mxu0 %v83
  %143 = vmatprep.subr.mxu0 0.0
  %144 = vmatpush1.msra.mxu0 %v84
  %145 = vmatprep.subr.mxu0 0.0
  %146 = vmatpush1.msra.mxu0 %v85
  %147 = vmatprep.subr.mxu0 0.0
  %148 = vmatpush1.msra.mxu0 %v86
  %149 = vmatprep.subr.mxu0 0.0
  %150 = vmatpush1.msra.mxu0 %v87
  %151 = vmatprep.subr.mxu0 0.0
  %152 = vmatpush1.msra.mxu0 %v88
  %153 = vmatprep.subr.mxu0 0.0
  %154 = vmatpush1.msra.mxu0 0.0
  %155 = vmatprep.subr.mxu0 0.0
  %156 = vmatpush1.msra.mxu0 0.0
  %157 = vmatprep.subr.mxu0 0.0
  %158 = vmatpush1.msra.mxu0 0.0
  %159 = vmatprep.subr.mxu0 0.0
  %160 = vmatpush1.msra.mxu0 0.0
  %161 = vmatprep.subr.mxu0 0.0
  %162 = vmatpush1.msra.mxu0 0.0
  %163 = vmatprep.subr.mxu0 0.0
  %164 = vmatpush1.msra.mxu0 0.0
  %165 = vmatprep.subr.mxu0 0.0
  %166 = vmatpush1.msra.mxu0 0.0
  %167 = vmatprep.subr.mxu0 0.0
  %168 = vmatpush1.msra.mxu0 0.0
  %169 = vmatprep.subr.mxu0 0.0
  %170 = vmatpush1.msra.mxu0 0.0
  %171 = vmatprep.subr.mxu0 0.0
  %172 = vmatpush1.msra.mxu0 0.0
  %173 = vmatprep.subr.mxu0 0.0
  %174 = vmatpush1.msra.mxu0 0.0
  %175 = vmatprep.subr.mxu0 0.0
  %176 = vmatpush1.msra.mxu0 0.0
  %177 = vmatprep.subr.mxu0 0.0
  %178 = vmatpush1.msra.mxu0 0.0
  %179 = vmatprep.subr.mxu0 0.0
  %180 = vmatpush1.msra.mxu0 0.0
  %181 = vmatprep.subr.mxu0 0.0
  %182 = vmatpush1.msra.mxu0 0.0
  %183 = vmatprep.subr.mxu0 0.0
  %184 = vmatpush1.msra.mxu0 0.0
  %185 = vmatprep.mubr.f32.mxu0 0.0
  %186 = vmatmul.mubr.f32.gmra.mrb[0].mxu0 %v105
  %v187 = vpop.f32.mrb[0].mxu0
  %v188 = vadd.f32 0.0, %v187
  %v189 = vpop.f32.mrb[0].mxu0
  %190 = vmatprep.mubr.f32.mxu0 0.0
  %191 = vmatmul.mubr.f32.gmra.mrb[0].mxu0 %v106
  %v192 = vpop.f32.mrb[0].mxu0
  %v193 = vadd.f32 0.0, %v192
  %v194 = vpop.f32.mrb[0].mxu0
  %195 = vmatprep.mubr.f32.mxu0 0.0
  %196 = vmatmul.mubr.f32.gmra.mrb[0].mxu0 %v107
  %v197 = vpop.f32.mrb[0].mxu0
  %v198 = vadd.f32 0.0, %v197
  %v199 = vpop.f32.mrb[0].mxu0
  %200 = vmatprep.mubr.f32.mxu0 0.0
  %201 = vmatmul.mubr.f32.gmra.mrb[0].mxu0 %v108
  %v202 = vpop.f32.mrb[0].mxu0
  %v203 = vadd.f32 0.0, %v202
  %v204 = vpop.f32.mrb[0].mxu0
  %205 = vmatprep.mubr.f32.mxu0 0.0
  %206 = vmatmul.mubr.f32.gmra.mrb[0].mxu0 %v109
  %v207 = vpop.f32.mrb[0].mxu0
  %v208 = vadd.f32 0.0, %v207
  %v209 = vpop.f32.mrb[0].mxu0
  %210 = vmatprep.mubr.f32.mxu0 0.0
  %211 = vmatmul.mubr.f32.gmra.mrb[0].mxu0 %v110
  %v212 = vpop.f32.mrb[0].mxu0
  %v213 = vadd.f32 0.0, %v212
  %v214 = vpop.f32.mrb[0].mxu0
  %215 = vmatprep.mubr.f32.mxu0 0.0
  %216 = vmatmul.mubr.f32.gmra.mrb[0].mxu0 %v111
  %v217 = vpop.f32.mrb[0].mxu0
  %v218 = vadd.f32 0.0, %v217
  %v219 = vpop.f32.mrb[0].mxu0
  %220 = vmatprep.mubr.f32.mxu0 0.0
  %221 = vmatmul.mubr.f32.gmra.mrb[0].mxu0 %v112
  %v222 = vpop.f32.mrb[0].mxu0
  %v223 = vadd.f32 0.0, %v222
  %v224 = vpop.f32.mrb[0].mxu0
  %225 = vmatprep.mubr.f32.mxu0 0.0
  %226 = vmatmul.mubr.f32.gmra.mrb[0].mxu0 %v113
  %v227 = vpop.f32.mrb[0].mxu0
  %v228 = vadd.f32 0.0, %v227
  %v229 = vpop.f32.mrb[0].mxu0
  %230 = vmatprep.mubr.f32.mxu0 0.0
  %231 = vmatmul.mubr.f32.gmra.mrb[0].mxu0 %v114
  %v232 = vpop.f32.mrb[0].mxu0
  %v233 = vadd.f32 0.0, %v232
  %v234 = vpop.f32.mrb[0].mxu0
  %235 = vmatprep.mubr.f32.mxu0 0.0
  %236 = vmatmul.mubr.f32.gmra.mrb[0].mxu0 %v115
  %v237 = vpop.f32.mrb[0].mxu0
  %v238 = vadd.f32 0.0, %v237
  %v239 = vpop.f32.mrb[0].mxu0
  %240 = vmatprep.mubr.f32.mxu0 0.0
  %241 = vmatmul.mubr.f32.gmra.mrb[0].mxu0 %v116
  %v242 = vpop.f32.mrb[0].mxu0
  %v243 = vadd.f32 0.0, %v242
  %v244 = vpop.f32.mrb[0].mxu0
  %245 = vmatprep.mubr.f32.mxu0 0.0
  %246 = vmatmul.mubr.f32.gmra.mrb[0].mxu0 %v117
  %v247 = vpop.f32.mrb[0].mxu0
  %v248 = vadd.f32 0.0, %v247
  %v249 = vpop.f32.mrb[0].mxu0
  %250 = vmatprep.mubr.f32.mxu0 0.0
  %251 = vmatmul.mubr.f32.gmra.mrb[0].mxu0 %v118
  %v252 = vpop.f32.mrb[0].mxu0
  %v253 = vadd.f32 0.0, %v252
  %v254 = vpop.f32.mrb[0].mxu0
  %255 = vmatprep.mubr.f32.mxu0 0.0
  %256 = vmatmul.mubr.f32.gmra.mrb[0].mxu0 %v119
  %v257 = vpop.f32.mrb[0].mxu0
  %v258 = vadd.f32 0.0, %v257
  %v259 = vpop.f32.mrb[0].mxu0
  %260 = vmatprep.mubr.f32.mxu0 0.0
  %261 = vmatmul.mubr.f32.gmra.mrb[0].mxu0 %v120
  %v262 = vpop.f32.mrb[0].mxu0
  %v263 = vadd.f32 0.0, %v262
  %v264 = vpop.f32.mrb[0].mxu0
  %265 = vdwg.mxu0
  %v266 = vadd.f32 %v89, %v188
  %v267 = vadd.f32 %v90, %v193
  %v268 = vadd.f32 %v91, %v198
  %v269 = vadd.f32 %v92, %v203
  %v270 = vadd.f32 %v93, %v208
  %v271 = vadd.f32 %v94, %v213
  %v272 = vadd.f32 %v95, %v218
  %v273 = vadd.f32 %v96, %v223
  %v274 = vadd.f32 %v97, %v228
  %v275 = vadd.f32 %v98, %v233
  %v276 = vadd.f32 %v99, %v238
  %v277 = vadd.f32 %v100, %v243
  %v278 = vadd.f32 %v101, %v248
  %v279 = vadd.f32 %v102, %v253
  %v280 = vadd.f32 %v103, %v258
  %v281 = vadd.f32 %v104, %v263
  %282 = vst [vmem:[#allocation2] sm:$0xff] %v266
  %283 = vst [vmem:[#allocation2 + $0x10] sm:$0xff] %v267
  %284 = vst [vmem:[#allocation2 + $0x20] sm:$0xff] %v268
  %285 = vst [vmem:[#allocation2 + $0x30] sm:$0xff] %v269
  %286 = vst [vmem:[#allocation2 + $0x40] sm:$0xff] %v270
  %287 = vst [vmem:[#allocation2 + $0x50] sm:$0xff] %v271
  %288 = vst [vmem:[#allocation2 + $0x60] sm:$0xff] %v272
  %289 = vst [vmem:[#allocation2 + $0x70] sm:$0xff] %v273
  %290 = vst [vmem:[#allocation2 + $0x80] sm:$0xff] %v274
  %291 = vst [vmem:[#allocation2 + $0x90] sm:$0xff] %v275
  %292 = vst [vmem:[#allocation2 + $0xa0] sm:$0xff] %v276
  %293 = vst [vmem:[#allocation2 + $0xb0] sm:$0xff] %v277
  %294 = vst [vmem:[#allocation2 + $0xc0] sm:$0xff] %v278
  %295 = vst [vmem:[#allocation2 + $0xd0] sm:$0xff] %v279
  %296 = vst [vmem:[#allocation2 + $0xe0] sm:$0xff] %v280
  %297 = vst [vmem:[#allocation2 + $0xf0] sm:$0xff] %v281
  // Predicated region
  $region22: #{improved_gcn_forward.3} parent=0 // pred_check
    %p298 = pneg %p17
  $region23: #{improved_gcn_forward.3} parent=0 // pred_check_branch
    %300 = sbr.rel (%p298) target = $region25
  $region24: #{improved_gcn_forward.3} parent=0 // pred_region
    %v301 = vld [vmem:[#allocation2] sm:$0xff]
    %v302 = vld [vmem:[#allocation2 + $0x8] sm:$0xff]
    %v303 = vld [vmem:[#allocation2 + $0x10] sm:$0xff]
    %v304 = vld [vmem:[#allocation2 + $0x18] sm:$0xff]
    %v305 = vld [vmem:[#allocation2 + $0x20] sm:$0xff]
    %v306 = vld [vmem:[#allocation2 + $0x28] sm:$0xff]
    %v307 = vld [vmem:[#allocation2 + $0x30] sm:$0xff]
    %v308 = vld [vmem:[#allocation2 + $0x38] sm:$0xff]
    %v309 = vld [vmem:[#allocation2 + $0x40] sm:$0xff]
    %v310 = vld [vmem:[#allocation2 + $0x48] sm:$0xff]
    %v311 = vld [vmem:[#allocation2 + $0x50] sm:$0xff]
    %v312 = vld [vmem:[#allocation2 + $0x58] sm:$0xff]
    %v313 = vld [vmem:[#allocation2 + $0x60] sm:$0xff]
    %v314 = vld [vmem:[#allocation2 + $0x68] sm:$0xff]
    %v315 = vld [vmem:[#allocation2 + $0x70] sm:$0xff]
    %v316 = vld [vmem:[#allocation2 + $0x78] sm:$0xff]
    %v317 = vld [vmem:[#allocation2 + $0x80] sm:$0xff]
    %v318 = vld [vmem:[#allocation2 + $0x88] sm:$0xff]
    %v319 = vld [vmem:[#allocation2 + $0x90] sm:$0xff]
    %v320 = vld [vmem:[#allocation2 + $0x98] sm:$0xff]
    %v321 = vld [vmem:[#allocation2 + $0xa0] sm:$0xff]
    %v322 = vld [vmem:[#allocation2 + $0xa8] sm:$0xff]
    %v323 = vld [vmem:[#allocation2 + $0xb0] sm:$0xff]
    %v324 = vld [vmem:[#allocation2 + $0xb8] sm:$0xff]
    %v325 = vld [vmem:[#allocation2 + $0xc0] sm:$0xff]
    %v326 = vld [vmem:[#allocation2 + $0xc8] sm:$0xff]
    %v327 = vld [vmem:[#allocation2 + $0xd0] sm:$0xff]
    %v328 = vld [vmem:[#allocation2 + $0xd8] sm:$0xff]
    %v329 = vld [vmem:[#allocation2 + $0xe0] sm:$0xff]
    %v330 = vld [vmem:[#allocation2 + $0xe8] sm:$0xff]
    %v331 = vld [vmem:[#allocation2 + $0xf0] sm:$0xff]
    %v332 = vld [vmem:[#allocation2 + $0xf8] sm:$0xff]
    %v333 = vld [vmem:[%s2] sm:$0xff]
    %v334 = vld [vmem:[%s2 + $0x8] sm:$0xff]
    %v335 = vld [vmem:[%s2 + $0x10] sm:$0xff]
    %v336 = vld [vmem:[%s2 + $0x18] sm:$0xff]
    %v337 = vld [vmem:[%s2 + $0x20] sm:$0xff]
    %v338 = vld [vmem:[%s2 + $0x28] sm:$0xff]
    %v339 = vld [vmem:[%s2 + $0x30] sm:$0xff]
    %v340 = vld [vmem:[%s2 + $0x38] sm:$0xff]
    %v341 = vld [vmem:[%s2 + $0x40] sm:$0xff]
    %v342 = vld [vmem:[%s2 + $0x48] sm:$0xff]
    %v343 = vld [vmem:[%s2 + $0x50] sm:$0xff]
    %v344 = vld [vmem:[%s2 + $0x58] sm:$0xff]
    %v345 = vld [vmem:[%s2 + $0x60] sm:$0xff]
    %v346 = vld [vmem:[%s2 + $0x68] sm:$0xff]
    %v347 = vld [vmem:[%s2 + $0x70] sm:$0xff]
    %v348 = vld [vmem:[%s2 + $0x78] sm:$0xff]
    %v349 = vld [vmem:[%s2 + $0x80] sm:$0xff]
    %v350 = vld [vmem:[%s2 + $0x88] sm:$0xff]
    %v351 = vld [vmem:[%s2 + $0x90] sm:$0xff]
    %v352 = vld [vmem:[%s2 + $0x98] sm:$0xff]
    %v353 = vld [vmem:[%s2 + $0xa0] sm:$0xff]
    %v354 = vld [vmem:[%s2 + $0xa8] sm:$0xff]
    %v355 = vld [vmem:[%s2 + $0xb0] sm:$0xff]
    %v356 = vld [vmem:[%s2 + $0xb8] sm:$0xff]
    %v357 = vld [vmem:[%s2 + $0xc0] sm:$0xff]
    %v358 = vld [vmem:[%s2 + $0xc8] sm:$0xff]
    %v359 = vld [vmem:[%s2 + $0xd0] sm:$0xff]
    %v360 = vld [vmem:[%s2 + $0xd8] sm:$0xff]
    %v361 = vld [vmem:[%s2 + $0xe0] sm:$0xff]
    %v362 = vld [vmem:[%s2 + $0xe8] sm:$0xff]
    %v363 = vld [vmem:[%s2 + $0xf0] sm:$0xff]
    %v364 = vld [vmem:[%s2 + $0xf8] sm:$0xff]
    %v365 = vld [vmem:[%s3] sm:$0x1]
    %v367 = vlaneseq
    %v368 = vshrl.u32 %v367, 7
    %v369 = vsub.s32 0, %v368
    %v370 = vrot.slane %v365, %v369
    %372 = vmatprep.subr.mxu0 0.0
    %373 = vmatpush1.msra.mxu0 %v333
    %374 = vmatprep.subr.mxu0 0.0
    %375 = vmatpush1.msra.mxu0 %v334
    %376 = vmatprep.subr.mxu0 0.0
    %377 = vmatpush1.msra.mxu0 %v335
    %378 = vmatprep.subr.mxu0 0.0
    %379 = vmatpush1.msra.mxu0 %v336
    %380 = vmatprep.subr.mxu0 0.0
    %381 = vmatpush1.msra.mxu0 %v337
    %382 = vmatprep.subr.mxu0 0.0
    %383 = vmatpush1.msra.mxu0 %v338
    %384 = vmatprep.subr.mxu0 0.0
    %385 = vmatpush1.msra.mxu0 %v339
    %386 = vmatprep.subr.mxu0 0.0
    %387 = vmatpush1.msra.mxu0 %v340
    %388 = vmatprep.subr.mxu0 0.0
    %389 = vmatpush1.msra.mxu0 %v341
    %390 = vmatprep.subr.mxu0 0.0
    %391 = vmatpush1.msra.mxu0 %v342
    %392 = vmatprep.subr.mxu0 0.0
    %393 = vmatpush1.msra.mxu0 %v343
    %394 = vmatprep.subr.mxu0 0.0
    %395 = vmatpush1.msra.mxu0 %v344
    %396 = vmatprep.subr.mxu0 0.0
    %397 = vmatpush1.msra.mxu0 %v345
    %398 = vmatprep.subr.mxu0 0.0
    %399 = vmatpush1.msra.mxu0 %v346
    %400 = vmatprep.subr.mxu0 0.0
    %401 = vmatpush1.msra.mxu0 %v347
    %402 = vmatprep.subr.mxu0 0.0
    %403 = vmatpush1.msra.mxu0 %v348
    %404 = vmatprep.subr.mxu0 0.0
    %405 = vmatpush1.msra.mxu0 %v349
    %406 = vmatprep.subr.mxu0 0.0
    %407 = vmatpush1.msra.mxu0 %v350
    %408 = vmatprep.subr.mxu0 0.0
    %409 = vmatpush1.msra.mxu0 %v351
    %410 = vmatprep.subr.mxu0 0.0
    %411 = vmatpush1.msra.mxu0 %v352
    %412 = vmatprep.subr.mxu0 0.0
    %413 = vmatpush1.msra.mxu0 %v353
    %414 = vmatprep.subr.mxu0 0.0
    %415 = vmatpush1.msra.mxu0 %v354
    %416 = vmatprep.subr.mxu0 0.0
    %417 = vmatpush1.msra.mxu0 %v355
    %418 = vmatprep.subr.mxu0 0.0
    %419 = vmatpush1.msra.mxu0 %v356
    %420 = vmatprep.subr.mxu0 0.0
    %421 = vmatpush1.msra.mxu0 %v357
    %422 = vmatprep.subr.mxu0 0.0
    %423 = vmatpush1.msra.mxu0 %v358
    %424 = vmatprep.subr.mxu0 0.0
    %425 = vmatpush1.msra.mxu0 %v359
    %426 = vmatprep.subr.mxu0 0.0
    %427 = vmatpush1.msra.mxu0 %v360
    %428 = vmatprep.subr.mxu0 0.0
    %429 = vmatpush1.msra.mxu0 %v361
    %430 = vmatprep.subr.mxu0 0.0
    %431 = vmatpush1.msra.mxu0 %v362
    %432 = vmatprep.subr.mxu0 0.0
    %433 = vmatpush1.msra.mxu0 %v363
    %434 = vmatprep.subr.mxu0 0.0
    %435 = vmatpush1.msra.mxu0 %v364
    %436 = vmatprep.mubr.f32.mxu0 %v302
    %437 = vmatmul.mubr.f32.gmra.mrb[0].mxu0 %v301
    %v438 = vpop.f32.mrb[0].mxu0
    %v439 = vadd.f32 %v370, %v438
    %v440 = vpop.f32.mrb[0].mxu0
    %441 = vmatprep.mubr.f32.mxu0 %v304
    %442 = vmatmul.mubr.f32.gmra.mrb[0].mxu0 %v303
    %v443 = vpop.f32.mrb[0].mxu0
    %v444 = vadd.f32 %v370, %v443
    %v445 = vpop.f32.mrb[0].mxu0
    %446 = vmatprep.mubr.f32.mxu0 %v306
    %447 = vmatmul.mubr.f32.gmra.mrb[0].mxu0 %v305
    %v448 = vpop.f32.mrb[0].mxu0
    %v449 = vadd.f32 %v370, %v448
    %v450 = vpop.f32.mrb[0].mxu0
    %451 = vmatprep.mubr.f32.mxu0 %v308
    %452 = vmatmul.mubr.f32.gmra.mrb[0].mxu0 %v307
    %v453 = vpop.f32.mrb[0].mxu0
    %v454 = vadd.f32 %v370, %v453
    %v455 = vpop.f32.mrb[0].mxu0
    %456 = vmatprep.mubr.f32.mxu0 %v310
    %457 = vmatmul.mubr.f32.gmra.mrb[0].mxu0 %v309
    %v458 = vpop.f32.mrb[0].mxu0
    %v459 = vadd.f32 %v370, %v458
    %v460 = vpop.f32.mrb[0].mxu0
    %461 = vmatprep.mubr.f32.mxu0 %v312
    %462 = vmatmul.mubr.f32.gmra.mrb[0].mxu0 %v311
    %v463 = vpop.f32.mrb[0].mxu0
    %v464 = vadd.f32 %v370, %v463
    %v465 = vpop.f32.mrb[0].mxu0
    %466 = vmatprep.mubr.f32.mxu0 %v314
    %467 = vmatmul.mubr.f32.gmra.mrb[0].mxu0 %v313
    %v468 = vpop.f32.mrb[0].mxu0
    %v469 = vadd.f32 %v370, %v468
    %v470 = vpop.f32.mrb[0].mxu0
    %471 = vmatprep.mubr.f32.mxu0 %v316
    %472 = vmatmul.mubr.f32.gmra.mrb[0].mxu0 %v315
    %v473 = vpop.f32.mrb[0].mxu0
    %v474 = vadd.f32 %v370, %v473
    %v475 = vpop.f32.mrb[0].mxu0
    %476 = vmatprep.mubr.f32.mxu0 %v318
    %477 = vmatmul.mubr.f32.gmra.mrb[0].mxu0 %v317
    %v478 = vpop.f32.mrb[0].mxu0
    %v479 = vadd.f32 %v370, %v478
    %v480 = vpop.f32.mrb[0].mxu0
    %481 = vmatprep.mubr.f32.mxu0 %v320
    %482 = vmatmul.mubr.f32.gmra.mrb[0].mxu0 %v319
    %v483 = vpop.f32.mrb[0].mxu0
    %v484 = vadd.f32 %v370, %v483
    %v485 = vpop.f32.mrb[0].mxu0
    %486 = vmatprep.mubr.f32.mxu0 %v322
    %487 = vmatmul.mubr.f32.gmra.mrb[0].mxu0 %v321
    %v488 = vpop.f32.mrb[0].mxu0
    %v489 = vadd.f32 %v370, %v488
    %v490 = vpop.f32.mrb[0].mxu0
    %491 = vmatprep.mubr.f32.mxu0 %v324
    %492 = vmatmul.mubr.f32.gmra.mrb[0].mxu0 %v323
    %v493 = vpop.f32.mrb[0].mxu0
    %v494 = vadd.f32 %v370, %v493
    %v495 = vpop.f32.mrb[0].mxu0
    %496 = vmatprep.mubr.f32.mxu0 %v326
    %497 = vmatmul.mubr.f32.gmra.mrb[0].mxu0 %v325
    %v498 = vpop.f32.mrb[0].mxu0
    %v499 = vadd.f32 %v370, %v498
    %v500 = vpop.f32.mrb[0].mxu0
    %501 = vmatprep.mubr.f32.mxu0 %v328
    %502 = vmatmul.mubr.f32.gmra.mrb[0].mxu0 %v327
    %v503 = vpop.f32.mrb[0].mxu0
    %v504 = vadd.f32 %v370, %v503
    %v505 = vpop.f32.mrb[0].mxu0
    %506 = vmatprep.mubr.f32.mxu0 %v330
    %507 = vmatmul.mubr.f32.gmra.mrb[0].mxu0 %v329
    %v508 = vpop.f32.mrb[0].mxu0
    %v509 = vadd.f32 %v370, %v508
    %v510 = vpop.f32.mrb[0].mxu0
    %511 = vmatprep.mubr.f32.mxu0 %v332
    %512 = vmatmul.mubr.f32.gmra.mrb[0].mxu0 %v331
    %v513 = vpop.f32.mrb[0].mxu0
    %v514 = vadd.f32 %v370, %v513
    %v515 = vpop.f32.mrb[0].mxu0
    %516 = vdwg.mxu0
    %517 = vst [vmem:[%s4] sm:$0xff] %v439
    %518 = vst [vmem:[%s4 + $0x8] sm:$0xff] %v444
    %519 = vst [vmem:[%s4 + $0x10] sm:$0xff] %v449
    %520 = vst [vmem:[%s4 + $0x18] sm:$0xff] %v454
    %521 = vst [vmem:[%s4 + $0x20] sm:$0xff] %v459
    %522 = vst [vmem:[%s4 + $0x28] sm:$0xff] %v464
    %523 = vst [vmem:[%s4 + $0x30] sm:$0xff] %v469
    %524 = vst [vmem:[%s4 + $0x38] sm:$0xff] %v474
    %525 = vst [vmem:[%s4 + $0x40] sm:$0xff] %v479
    %526 = vst [vmem:[%s4 + $0x48] sm:$0xff] %v484
    %527 = vst [vmem:[%s4 + $0x50] sm:$0xff] %v489
    %528 = vst [vmem:[%s4 + $0x58] sm:$0xff] %v494
    %529 = vst [vmem:[%s4 + $0x60] sm:$0xff] %v499
    %530 = vst [vmem:[%s4 + $0x68] sm:$0xff] %v504
    %531 = vst [vmem:[%s4 + $0x70] sm:$0xff] %v509
    %532 = vst [vmem:[%s4 + $0x78] sm:$0xff] %v514
  $region25: #{improved_gcn_forward.3} parent=0 // pred_fallthru
    _
  // Predicated region
  $region26: #{improved_gcn_forward.3} parent=0 // pred_check
    _
  $region27: #{improved_gcn_forward.3} parent=0 // pred_check_branch
    %534 = sbr.rel (0) target = $region29
  $region28: #{improved_gcn_forward.3} parent=0 // pred_region
    _
  $region29: #{improved_gcn_forward.3} parent=0 // pred_fallthru
    _
  // Predicated region
  $region30: #{improved_gcn_forward.3} parent=0 // pred_check
    _
  $region31: #{improved_gcn_forward.3} parent=0 // pred_check_branch
    %536 = sbr.rel (0) target = $region33
  $region32: #{improved_gcn_forward.3} parent=0 // pred_region
    _
  $region33: #{improved_gcn_forward.3} parent=0 // pred_fallthru
    _

// kernel: improved_gcn_forward.2
$region0: #{improved_gcn_forward.2}
  #allocation0 [shape = 'u32[]', space=smem, size = 0x4, offset = 0x4, fixed_abs, tag = 'smem constant byte address 0x4 - core index']
  #allocation1 [shape = 'u32[144,128]{1,0:T(1,128)}', space=vmem, size = 0x12000, scoped, tag = 'internal scratch']
  #allocation2 [shape = 'f32[128,256]{1,0:T(8,128)}', space=vmem, size = 0x20000, scoped, tag = 'scratch operand']
  %s0 = inlined_call_operand.vmem [shape: f32[128,128], index: 0, kind: input, shape index: {}]
  %s1 = inlined_call_operand.vmem [shape: f32[128,128], index: 1, kind: input, shape index: {}]
  %s2 = inlined_call_operand.vmem [shape: f32[256,128], index: 2, kind: input, shape index: {}]
  %s3 = inlined_call_operand.vmem [shape: f32[1,128], index: 3, kind: input, shape index: {}]
  %s4 = inlined_call_operand.vmem [shape: f32[128,128], index: 4, kind: output, shape index: {}]
  %s5 = sld [smem:[#allocation0]]
  $region34: #{improved_gcn_forward.2} parent=0
    _
  %s7 = ssub.s32 1, %s5
  %s8 = scalar_select 0, %s7, %s5
  // Predicated region
  $region2: #{improved_gcn_forward.2} parent=0 // pred_check
    _
  $region3: #{improved_gcn_forward.2} parent=0 // pred_check_branch
    %10 = sbr.rel (0) target = $region5
  $region4: #{improved_gcn_forward.2} parent=0 // pred_region
    _
  $region5: #{improved_gcn_forward.2} parent=0 // pred_fallthru
    _
  // Predicated region
  $region6: #{improved_gcn_forward.2} parent=0 // pred_check
    _
  $region7: #{improved_gcn_forward.2} parent=0 // pred_check_branch
    %12 = sbr.rel (0) target = $region9
  $region8: #{improved_gcn_forward.2} parent=0 // pred_region
    _
  $region9: #{improved_gcn_forward.2} parent=0 // pred_fallthru
    _
  // Predicated region
  $region10: #{improved_gcn_forward.2} parent=0 // pred_check
    _
  $region11: #{improved_gcn_forward.2} parent=0 // pred_check_branch
    %14 = sbr.rel (0) target = $region13
  $region12: #{improved_gcn_forward.2} parent=0 // pred_region
    _
  $region13: #{improved_gcn_forward.2} parent=0 // pred_fallthru
    _
  // Predicated region
  $region14: #{improved_gcn_forward.2} parent=0 // pred_check
    _
  $region15: #{improved_gcn_forward.2} parent=0 // pred_check_branch
    %16 = sbr.rel (0) target = $region17
  $region16: #{improved_gcn_forward.2} parent=0 // pred_region
    _
  $region17: #{improved_gcn_forward.2} parent=0 // pred_fallthru
    _
  %p17 = scmp.eq.s32.totalorder 0, 0
  // Predicated region
  $region18: #{improved_gcn_forward.2} parent=0 // pred_check
    %p18 = pneg %p17
  $region19: #{improved_gcn_forward.2} parent=0 // pred_check_branch
    %20 = sbr.rel (%p18) target = $region21
  $region20: #{improved_gcn_forward.2} parent=0 // pred_region
    %21 = vst [vmem:[#allocation2] sm:$0xff] 0.0
    %22 = vst [vmem:[#allocation2 + $0x10] sm:$0xff] 0.0
    %23 = vst [vmem:[#allocation2 + $0x20] sm:$0xff] 0.0
    %24 = vst [vmem:[#allocation2 + $0x30] sm:$0xff] 0.0
    %25 = vst [vmem:[#allocation2 + $0x40] sm:$0xff] 0.0
    %26 = vst [vmem:[#allocation2 + $0x50] sm:$0xff] 0.0
    %27 = vst [vmem:[#allocation2 + $0x60] sm:$0xff] 0.0
    %28 = vst [vmem:[#allocation2 + $0x70] sm:$0xff] 0.0
    %29 = vst [vmem:[#allocation2 + $0x80] sm:$0xff] 0.0
    %30 = vst [vmem:[#allocation2 + $0x90] sm:$0xff] 0.0
    %31 = vst [vmem:[#allocation2 + $0xa0] sm:$0xff] 0.0
    %32 = vst [vmem:[#allocation2 + $0xb0] sm:$0xff] 0.0
    %33 = vst [vmem:[#allocation2 + $0xc0] sm:$0xff] 0.0
    %34 = vst [vmem:[#allocation2 + $0xd0] sm:$0xff] 0.0
    %35 = vst [vmem:[#allocation2 + $0xe0] sm:$0xff] 0.0
    %36 = vst [vmem:[#allocation2 + $0xf0] sm:$0xff] 0.0
    %s37 = smul.u32 0, 128
    %s38 = scalar_lea.vmem %s1, %s37
    %v39 = vld [vmem:[%s38] sm:$0xff]
    %v40 = vld [vmem:[%s38 + $0x8] sm:$0xff]
    %v41 = vld [vmem:[%s38 + $0x10] sm:$0xff]
    %v42 = vld [vmem:[%s38 + $0x18] sm:$0xff]
    %v43 = vld [vmem:[%s38 + $0x20] sm:$0xff]
    %v44 = vld [vmem:[%s38 + $0x28] sm:$0xff]
    %v45 = vld [vmem:[%s38 + $0x30] sm:$0xff]
    %v46 = vld [vmem:[%s38 + $0x38] sm:$0xff]
    %v47 = vld [vmem:[%s38 + $0x40] sm:$0xff]
    %v48 = vld [vmem:[%s38 + $0x48] sm:$0xff]
    %v49 = vld [vmem:[%s38 + $0x50] sm:$0xff]
    %v50 = vld [vmem:[%s38 + $0x58] sm:$0xff]
    %v51 = vld [vmem:[%s38 + $0x60] sm:$0xff]
    %v52 = vld [vmem:[%s38 + $0x68] sm:$0xff]
    %v53 = vld [vmem:[%s38 + $0x70] sm:$0xff]
    %v54 = vld [vmem:[%s38 + $0x78] sm:$0xff]
    %55 = vst [vmem:[#allocation2 + $0x8] sm:$0xff] %v39
    %56 = vst [vmem:[#allocation2 + $0x18] sm:$0xff] %v40
    %57 = vst [vmem:[#allocation2 + $0x28] sm:$0xff] %v41
    %58 = vst [vmem:[#allocation2 + $0x38] sm:$0xff] %v42
    %59 = vst [vmem:[#allocation2 + $0x48] sm:$0xff] %v43
    %60 = vst [vmem:[#allocation2 + $0x58] sm:$0xff] %v44
    %61 = vst [vmem:[#allocation2 + $0x68] sm:$0xff] %v45
    %62 = vst [vmem:[#allocation2 + $0x78] sm:$0xff] %v46
    %63 = vst [vmem:[#allocation2 + $0x88] sm:$0xff] %v47
    %64 = vst [vmem:[#allocation2 + $0x98] sm:$0xff] %v48
    %65 = vst [vmem:[#allocation2 + $0xa8] sm:$0xff] %v49
    %66 = vst [vmem:[#allocation2 + $0xb8] sm:$0xff] %v50
    %67 = vst [vmem:[#allocation2 + $0xc8] sm:$0xff] %v51
    %68 = vst [vmem:[#allocation2 + $0xd8] sm:$0xff] %v52
    %69 = vst [vmem:[#allocation2 + $0xe8] sm:$0xff] %v53
    %70 = vst [vmem:[#allocation2 + $0xf8] sm:$0xff] %v54
  $region21: #{improved_gcn_forward.2} parent=0 // pred_fallthru
    _
  %s71 = smul.u32 0, 128
  %s72 = scalar_lea.vmem %s1, %s71
  %v73 = vld [vmem:[%s72] sm:$0xff]
  %v74 = vld [vmem:[%s72 + $0x8] sm:$0xff]
  %v75 = vld [vmem:[%s72 + $0x10] sm:$0xff]
  %v76 = vld [vmem:[%s72 + $0x18] sm:$0xff]
  %v77 = vld [vmem:[%s72 + $0x20] sm:$0xff]
  %v78 = vld [vmem:[%s72 + $0x28] sm:$0xff]
  %v79 = vld [vmem:[%s72 + $0x30] sm:$0xff]
  %v80 = vld [vmem:[%s72 + $0x38] sm:$0xff]
  %v81 = vld [vmem:[%s72 + $0x40] sm:$0xff]
  %v82 = vld [vmem:[%s72 + $0x48] sm:$0xff]
  %v83 = vld [vmem:[%s72 + $0x50] sm:$0xff]
  %v84 = vld [vmem:[%s72 + $0x58] sm:$0xff]
  %v85 = vld [vmem:[%s72 + $0x60] sm:$0xff]
  %v86 = vld [vmem:[%s72 + $0x68] sm:$0xff]
  %v87 = vld [vmem:[%s72 + $0x70] sm:$0xff]
  %v88 = vld [vmem:[%s72 + $0x78] sm:$0xff]
  %v89 = vld [vmem:[#allocation2] sm:$0xff]
  %v90 = vld [vmem:[#allocation2 + $0x10] sm:$0xff]
  %v91 = vld [vmem:[#allocation2 + $0x20] sm:$0xff]
  %v92 = vld [vmem:[#allocation2 + $0x30] sm:$0xff]
  %v93 = vld [vmem:[#allocation2 + $0x40] sm:$0xff]
  %v94 = vld [vmem:[#allocation2 + $0x50] sm:$0xff]
  %v95 = vld [vmem:[#allocation2 + $0x60] sm:$0xff]
  %v96 = vld [vmem:[#allocation2 + $0x70] sm:$0xff]
  %v97 = vld [vmem:[#allocation2 + $0x80] sm:$0xff]
  %v98 = vld [vmem:[#allocation2 + $0x90] sm:$0xff]
  %v99 = vld [vmem:[#allocation2 + $0xa0] sm:$0xff]
  %v100 = vld [vmem:[#allocation2 + $0xb0] sm:$0xff]
  %v101 = vld [vmem:[#allocation2 + $0xc0] sm:$0xff]
  %v102 = vld [vmem:[#allocation2 + $0xd0] sm:$0xff]
  %v103 = vld [vmem:[#allocation2 + $0xe0] sm:$0xff]
  %v104 = vld [vmem:[#allocation2 + $0xf0] sm:$0xff]
  %v105 = vld [vmem:[%s0] sm:$0xff]
  %v106 = vld [vmem:[%s0 + $0x8] sm:$0xff]
  %v107 = vld [vmem:[%s0 + $0x10] sm:$0xff]
  %v108 = vld [vmem:[%s0 + $0x18] sm:$0xff]
  %v109 = vld [vmem:[%s0 + $0x20] sm:$0xff]
  %v110 = vld [vmem:[%s0 + $0x28] sm:$0xff]
  %v111 = vld [vmem:[%s0 + $0x30] sm:$0xff]
  %v112 = vld [vmem:[%s0 + $0x38] sm:$0xff]
  %v113 = vld [vmem:[%s0 + $0x40] sm:$0xff]
  %v114 = vld [vmem:[%s0 + $0x48] sm:$0xff]
  %v115 = vld [vmem:[%s0 + $0x50] sm:$0xff]
  %v116 = vld [vmem:[%s0 + $0x58] sm:$0xff]
  %v117 = vld [vmem:[%s0 + $0x60] sm:$0xff]
  %v118 = vld [vmem:[%s0 + $0x68] sm:$0xff]
  %v119 = vld [vmem:[%s0 + $0x70] sm:$0xff]
  %v120 = vld [vmem:[%s0 + $0x78] sm:$0xff]
  %121 = vmatprep.subr.mxu0 0.0
  %122 = vmatpush1.msra.mxu0 %v73
  %123 = vmatprep.subr.mxu0 0.0
  %124 = vmatpush1.msra.mxu0 %v74
  %125 = vmatprep.subr.mxu0 0.0
  %126 = vmatpush1.msra.mxu0 %v75
  %127 = vmatprep.subr.mxu0 0.0
  %128 = vmatpush1.msra.mxu0 %v76
  %129 = vmatprep.subr.mxu0 0.0
  %130 = vmatpush1.msra.mxu0 %v77
  %131 = vmatprep.subr.mxu0 0.0
  %132 = vmatpush1.msra.mxu0 %v78
  %133 = vmatprep.subr.mxu0 0.0
  %134 = vmatpush1.msra.mxu0 %v79
  %135 = vmatprep.subr.mxu0 0.0
  %136 = vmatpush1.msra.mxu0 %v80
  %137 = vmatprep.subr.mxu0 0.0
  %138 = vmatpush1.msra.mxu0 %v81
  %139 = vmatprep.subr.mxu0 0.0
  %140 = vmatpush1.msra.mxu0 %v82
  %141 = vmatprep.subr.mxu0 0.0
  %142 = vmatpush1.msra.mxu0 %v83
  %143 = vmatprep.subr.mxu0 0.0
  %144 = vmatpush1.msra.mxu0 %v84
  %145 = vmatprep.subr.mxu0 0.0
  %146 = vmatpush1.msra.mxu0 %v85
  %147 = vmatprep.subr.mxu0 0.0
  %148 = vmatpush1.msra.mxu0 %v86
  %149 = vmatprep.subr.mxu0 0.0
  %150 = vmatpush1.msra.mxu0 %v87
  %151 = vmatprep.subr.mxu0 0.0
  %152 = vmatpush1.msra.mxu0 %v88
  %153 = vmatprep.subr.mxu0 0.0
  %154 = vmatpush1.msra.mxu0 0.0
  %155 = vmatprep.subr.mxu0 0.0
  %156 = vmatpush1.msra.mxu0 0.0
  %157 = vmatprep.subr.mxu0 0.0
  %158 = vmatpush1.msra.mxu0 0.0
  %159 = vmatprep.subr.mxu0 0.0
  %160 = vmatpush1.msra.mxu0 0.0
  %161 = vmatprep.subr.mxu0 0.0
  %162 = vmatpush1.msra.mxu0 0.0
  %163 = vmatprep.subr.mxu0 0.0
  %164 = vmatpush1.msra.mxu0 0.0
  %165 = vmatprep.subr.mxu0 0.0
  %166 = vmatpush1.msra.mxu0 0.0
  %167 = vmatprep.subr.mxu0 0.0
  %168 = vmatpush1.msra.mxu0 0.0
  %169 = vmatprep.subr.mxu0 0.0
  %170 = vmatpush1.msra.mxu0 0.0
  %171 = vmatprep.subr.mxu0 0.0
  %172 = vmatpush1.msra.mxu0 0.0
  %173 = vmatprep.subr.mxu0 0.0
  %174 = vmatpush1.msra.mxu0 0.0
  %175 = vmatprep.subr.mxu0 0.0
  %176 = vmatpush1.msra.mxu0 0.0
  %177 = vmatprep.subr.mxu0 0.0
  %178 = vmatpush1.msra.mxu0 0.0
  %179 = vmatprep.subr.mxu0 0.0
  %180 = vmatpush1.msra.mxu0 0.0
  %181 = vmatprep.subr.mxu0 0.0
  %182 = vmatpush1.msra.mxu0 0.0
  %183 = vmatprep.subr.mxu0 0.0
  %184 = vmatpush1.msra.mxu0 0.0
  %185 = vmatprep.mubr.f32.mxu0 0.0
  %186 = vmatmul.mubr.f32.gmra.mrb[0].mxu0 %v105
  %v187 = vpop.f32.mrb[0].mxu0
  %v188 = vadd.f32 0.0, %v187
  %v189 = vpop.f32.mrb[0].mxu0
  %190 = vmatprep.mubr.f32.mxu0 0.0
  %191 = vmatmul.mubr.f32.gmra.mrb[0].mxu0 %v106
  %v192 = vpop.f32.mrb[0].mxu0
  %v193 = vadd.f32 0.0, %v192
  %v194 = vpop.f32.mrb[0].mxu0
  %195 = vmatprep.mubr.f32.mxu0 0.0
  %196 = vmatmul.mubr.f32.gmra.mrb[0].mxu0 %v107
  %v197 = vpop.f32.mrb[0].mxu0
  %v198 = vadd.f32 0.0, %v197
  %v199 = vpop.f32.mrb[0].mxu0
  %200 = vmatprep.mubr.f32.mxu0 0.0
  %201 = vmatmul.mubr.f32.gmra.mrb[0].mxu0 %v108
  %v202 = vpop.f32.mrb[0].mxu0
  %v203 = vadd.f32 0.0, %v202
  %v204 = vpop.f32.mrb[0].mxu0
  %205 = vmatprep.mubr.f32.mxu0 0.0
  %206 = vmatmul.mubr.f32.gmra.mrb[0].mxu0 %v109
  %v207 = vpop.f32.mrb[0].mxu0
  %v208 = vadd.f32 0.0, %v207
  %v209 = vpop.f32.mrb[0].mxu0
  %210 = vmatprep.mubr.f32.mxu0 0.0
  %211 = vmatmul.mubr.f32.gmra.mrb[0].mxu0 %v110
  %v212 = vpop.f32.mrb[0].mxu0
  %v213 = vadd.f32 0.0, %v212
  %v214 = vpop.f32.mrb[0].mxu0
  %215 = vmatprep.mubr.f32.mxu0 0.0
  %216 = vmatmul.mubr.f32.gmra.mrb[0].mxu0 %v111
  %v217 = vpop.f32.mrb[0].mxu0
  %v218 = vadd.f32 0.0, %v217
  %v219 = vpop.f32.mrb[0].mxu0
  %220 = vmatprep.mubr.f32.mxu0 0.0
  %221 = vmatmul.mubr.f32.gmra.mrb[0].mxu0 %v112
  %v222 = vpop.f32.mrb[0].mxu0
  %v223 = vadd.f32 0.0, %v222
  %v224 = vpop.f32.mrb[0].mxu0
  %225 = vmatprep.mubr.f32.mxu0 0.0
  %226 = vmatmul.mubr.f32.gmra.mrb[0].mxu0 %v113
  %v227 = vpop.f32.mrb[0].mxu0
  %v228 = vadd.f32 0.0, %v227
  %v229 = vpop.f32.mrb[0].mxu0
  %230 = vmatprep.mubr.f32.mxu0 0.0
  %231 = vmatmul.mubr.f32.gmra.mrb[0].mxu0 %v114
  %v232 = vpop.f32.mrb[0].mxu0
  %v233 = vadd.f32 0.0, %v232
  %v234 = vpop.f32.mrb[0].mxu0
  %235 = vmatprep.mubr.f32.mxu0 0.0
  %236 = vmatmul.mubr.f32.gmra.mrb[0].mxu0 %v115
  %v237 = vpop.f32.mrb[0].mxu0
  %v238 = vadd.f32 0.0, %v237
  %v239 = vpop.f32.mrb[0].mxu0
  %240 = vmatprep.mubr.f32.mxu0 0.0
  %241 = vmatmul.mubr.f32.gmra.mrb[0].mxu0 %v116
  %v242 = vpop.f32.mrb[0].mxu0
  %v243 = vadd.f32 0.0, %v242
  %v244 = vpop.f32.mrb[0].mxu0
  %245 = vmatprep.mubr.f32.mxu0 0.0
  %246 = vmatmul.mubr.f32.gmra.mrb[0].mxu0 %v117
  %v247 = vpop.f32.mrb[0].mxu0
  %v248 = vadd.f32 0.0, %v247
  %v249 = vpop.f32.mrb[0].mxu0
  %250 = vmatprep.mubr.f32.mxu0 0.0
  %251 = vmatmul.mubr.f32.gmra.mrb[0].mxu0 %v118
  %v252 = vpop.f32.mrb[0].mxu0
  %v253 = vadd.f32 0.0, %v252
  %v254 = vpop.f32.mrb[0].mxu0
  %255 = vmatprep.mubr.f32.mxu0 0.0
  %256 = vmatmul.mubr.f32.gmra.mrb[0].mxu0 %v119
  %v257 = vpop.f32.mrb[0].mxu0
  %v258 = vadd.f32 0.0, %v257
  %v259 = vpop.f32.mrb[0].mxu0
  %260 = vmatprep.mubr.f32.mxu0 0.0
  %261 = vmatmul.mubr.f32.gmra.mrb[0].mxu0 %v120
  %v262 = vpop.f32.mrb[0].mxu0
  %v263 = vadd.f32 0.0, %v262
  %v264 = vpop.f32.mrb[0].mxu0
  %265 = vdwg.mxu0
  %v266 = vadd.f32 %v89, %v188
  %v267 = vadd.f32 %v90, %v193
  %v268 = vadd.f32 %v91, %v198
  %v269 = vadd.f32 %v92, %v203
  %v270 = vadd.f32 %v93, %v208
  %v271 = vadd.f32 %v94, %v213
  %v272 = vadd.f32 %v95, %v218
  %v273 = vadd.f32 %v96, %v223
  %v274 = vadd.f32 %v97, %v228
  %v275 = vadd.f32 %v98, %v233
  %v276 = vadd.f32 %v99, %v238
  %v277 = vadd.f32 %v100, %v243
  %v278 = vadd.f32 %v101, %v248
  %v279 = vadd.f32 %v102, %v253
  %v280 = vadd.f32 %v103, %v258
  %v281 = vadd.f32 %v104, %v263
  %282 = vst [vmem:[#allocation2] sm:$0xff] %v266
  %283 = vst [vmem:[#allocation2 + $0x10] sm:$0xff] %v267
  %284 = vst [vmem:[#allocation2 + $0x20] sm:$0xff] %v268
  %285 = vst [vmem:[#allocation2 + $0x30] sm:$0xff] %v269
  %286 = vst [vmem:[#allocation2 + $0x40] sm:$0xff] %v270
  %287 = vst [vmem:[#allocation2 + $0x50] sm:$0xff] %v271
  %288 = vst [vmem:[#allocation2 + $0x60] sm:$0xff] %v272
  %289 = vst [vmem:[#allocation2 + $0x70] sm:$0xff] %v273
  %290 = vst [vmem:[#allocation2 + $0x80] sm:$0xff] %v274
  %291 = vst [vmem:[#allocation2 + $0x90] sm:$0xff] %v275
  %292 = vst [vmem:[#allocation2 + $0xa0] sm:$0xff] %v276
  %293 = vst [vmem:[#allocation2 + $0xb0] sm:$0xff] %v277
  %294 = vst [vmem:[#allocation2 + $0xc0] sm:$0xff] %v278
  %295 = vst [vmem:[#allocation2 + $0xd0] sm:$0xff] %v279
  %296 = vst [vmem:[#allocation2 + $0xe0] sm:$0xff] %v280
  %297 = vst [vmem:[#allocation2 + $0xf0] sm:$0xff] %v281
  // Predicated region
  $region22: #{improved_gcn_forward.2} parent=0 // pred_check
    %p298 = pneg %p17
  $region23: #{improved_gcn_forward.2} parent=0 // pred_check_branch
    %300 = sbr.rel (%p298) target = $region25
  $region24: #{improved_gcn_forward.2} parent=0 // pred_region
    %v301 = vld [vmem:[#allocation2] sm:$0xff]
    %v302 = vld [vmem:[#allocation2 + $0x8] sm:$0xff]
    %v303 = vld [vmem:[#allocation2 + $0x10] sm:$0xff]
    %v304 = vld [vmem:[#allocation2 + $0x18] sm:$0xff]
    %v305 = vld [vmem:[#allocation2 + $0x20] sm:$0xff]
    %v306 = vld [vmem:[#allocation2 + $0x28] sm:$0xff]
    %v307 = vld [vmem:[#allocation2 + $0x30] sm:$0xff]
    %v308 = vld [vmem:[#allocation2 + $0x38] sm:$0xff]
    %v309 = vld [vmem:[#allocation2 + $0x40] sm:$0xff]
    %v310 = vld [vmem:[#allocation2 + $0x48] sm:$0xff]
    %v311 = vld [vmem:[#allocation2 + $0x50] sm:$0xff]
    %v312 = vld [vmem:[#allocation2 + $0x58] sm:$0xff]
    %v313 = vld [vmem:[#allocation2 + $0x60] sm:$0xff]
    %v314 = vld [vmem:[#allocation2 + $0x68] sm:$0xff]
    %v315 = vld [vmem:[#allocation2 + $0x70] sm:$0xff]
    %v316 = vld [vmem:[#allocation2 + $0x78] sm:$0xff]
    %v317 = vld [vmem:[#allocation2 + $0x80] sm:$0xff]
    %v318 = vld [vmem:[#allocation2 + $0x88] sm:$0xff]
    %v319 = vld [vmem:[#allocation2 + $0x90] sm:$0xff]
    %v320 = vld [vmem:[#allocation2 + $0x98] sm:$0xff]
    %v321 = vld [vmem:[#allocation2 + $0xa0] sm:$0xff]
    %v322 = vld [vmem:[#allocation2 + $0xa8] sm:$0xff]
    %v323 = vld [vmem:[#allocation2 + $0xb0] sm:$0xff]
    %v324 = vld [vmem:[#allocation2 + $0xb8] sm:$0xff]
    %v325 = vld [vmem:[#allocation2 + $0xc0] sm:$0xff]
    %v326 = vld [vmem:[#allocation2 + $0xc8] sm:$0xff]
    %v327 = vld [vmem:[#allocation2 + $0xd0] sm:$0xff]
    %v328 = vld [vmem:[#allocation2 + $0xd8] sm:$0xff]
    %v329 = vld [vmem:[#allocation2 + $0xe0] sm:$0xff]
    %v330 = vld [vmem:[#allocation2 + $0xe8] sm:$0xff]
    %v331 = vld [vmem:[#allocation2 + $0xf0] sm:$0xff]
    %v332 = vld [vmem:[#allocation2 + $0xf8] sm:$0xff]
    %v333 = vld [vmem:[%s2] sm:$0xff]
    %v334 = vld [vmem:[%s2 + $0x8] sm:$0xff]
    %v335 = vld [vmem:[%s2 + $0x10] sm:$0xff]
    %v336 = vld [vmem:[%s2 + $0x18] sm:$0xff]
    %v337 = vld [vmem:[%s2 + $0x20] sm:$0xff]
    %v338 = vld [vmem:[%s2 + $0x28] sm:$0xff]
    %v339 = vld [vmem:[%s2 + $0x30] sm:$0xff]
    %v340 = vld [vmem:[%s2 + $0x38] sm:$0xff]
    %v341 = vld [vmem:[%s2 + $0x40] sm:$0xff]
    %v342 = vld [vmem:[%s2 + $0x48] sm:$0xff]
    %v343 = vld [vmem:[%s2 + $0x50] sm:$0xff]
    %v344 = vld [vmem:[%s2 + $0x58] sm:$0xff]
    %v345 = vld [vmem:[%s2 + $0x60] sm:$0xff]
    %v346 = vld [vmem:[%s2 + $0x68] sm:$0xff]
    %v347 = vld [vmem:[%s2 + $0x70] sm:$0xff]
    %v348 = vld [vmem:[%s2 + $0x78] sm:$0xff]
    %v349 = vld [vmem:[%s2 + $0x80] sm:$0xff]
    %v350 = vld [vmem:[%s2 + $0x88] sm:$0xff]
    %v351 = vld [vmem:[%s2 + $0x90] sm:$0xff]
    %v352 = vld [vmem:[%s2 + $0x98] sm:$0xff]
    %v353 = vld [vmem:[%s2 + $0xa0] sm:$0xff]
    %v354 = vld [vmem:[%s2 + $0xa8] sm:$0xff]
    %v355 = vld [vmem:[%s2 + $0xb0] sm:$0xff]
    %v356 = vld [vmem:[%s2 + $0xb8] sm:$0xff]
    %v357 = vld [vmem:[%s2 + $0xc0] sm:$0xff]
    %v358 = vld [vmem:[%s2 + $0xc8] sm:$0xff]
    %v359 = vld [vmem:[%s2 + $0xd0] sm:$0xff]
    %v360 = vld [vmem:[%s2 + $0xd8] sm:$0xff]
    %v361 = vld [vmem:[%s2 + $0xe0] sm:$0xff]
    %v362 = vld [vmem:[%s2 + $0xe8] sm:$0xff]
    %v363 = vld [vmem:[%s2 + $0xf0] sm:$0xff]
    %v364 = vld [vmem:[%s2 + $0xf8] sm:$0xff]
    %v365 = vld [vmem:[%s3] sm:$0x1]
    %v367 = vlaneseq
    %v368 = vshrl.u32 %v367, 7
    %v369 = vsub.s32 0, %v368
    %v370 = vrot.slane %v365, %v369
    %372 = vmatprep.subr.mxu0 0.0
    %373 = vmatpush1.msra.mxu0 %v333
    %374 = vmatprep.subr.mxu0 0.0
    %375 = vmatpush1.msra.mxu0 %v334
    %376 = vmatprep.subr.mxu0 0.0
    %377 = vmatpush1.msra.mxu0 %v335
    %378 = vmatprep.subr.mxu0 0.0
    %379 = vmatpush1.msra.mxu0 %v336
    %380 = vmatprep.subr.mxu0 0.0
    %381 = vmatpush1.msra.mxu0 %v337
    %382 = vmatprep.subr.mxu0 0.0
    %383 = vmatpush1.msra.mxu0 %v338
    %384 = vmatprep.subr.mxu0 0.0
    %385 = vmatpush1.msra.mxu0 %v339
    %386 = vmatprep.subr.mxu0 0.0
    %387 = vmatpush1.msra.mxu0 %v340
    %388 = vmatprep.subr.mxu0 0.0
    %389 = vmatpush1.msra.mxu0 %v341
    %390 = vmatprep.subr.mxu0 0.0
    %391 = vmatpush1.msra.mxu0 %v342
    %392 = vmatprep.subr.mxu0 0.0
    %393 = vmatpush1.msra.mxu0 %v343
    %394 = vmatprep.subr.mxu0 0.0
    %395 = vmatpush1.msra.mxu0 %v344
    %396 = vmatprep.subr.mxu0 0.0
    %397 = vmatpush1.msra.mxu0 %v345
    %398 = vmatprep.subr.mxu0 0.0
    %399 = vmatpush1.msra.mxu0 %v346
    %400 = vmatprep.subr.mxu0 0.0
    %401 = vmatpush1.msra.mxu0 %v347
    %402 = vmatprep.subr.mxu0 0.0
    %403 = vmatpush1.msra.mxu0 %v348
    %404 = vmatprep.subr.mxu0 0.0
    %405 = vmatpush1.msra.mxu0 %v349
    %406 = vmatprep.subr.mxu0 0.0
    %407 = vmatpush1.msra.mxu0 %v350
    %408 = vmatprep.subr.mxu0 0.0
    %409 = vmatpush1.msra.mxu0 %v351
    %410 = vmatprep.subr.mxu0 0.0
    %411 = vmatpush1.msra.mxu0 %v352
    %412 = vmatprep.subr.mxu0 0.0
    %413 = vmatpush1.msra.mxu0 %v353
    %414 = vmatprep.subr.mxu0 0.0
    %415 = vmatpush1.msra.mxu0 %v354
    %416 = vmatprep.subr.mxu0 0.0
    %417 = vmatpush1.msra.mxu0 %v355
    %418 = vmatprep.subr.mxu0 0.0
    %419 = vmatpush1.msra.mxu0 %v356
    %420 = vmatprep.subr.mxu0 0.0
    %421 = vmatpush1.msra.mxu0 %v357
    %422 = vmatprep.subr.mxu0 0.0
    %423 = vmatpush1.msra.mxu0 %v358
    %424 = vmatprep.subr.mxu0 0.0
    %425 = vmatpush1.msra.mxu0 %v359
    %426 = vmatprep.subr.mxu0 0.0
    %427 = vmatpush1.msra.mxu0 %v360
    %428 = vmatprep.subr.mxu0 0.0
    %429 = vmatpush1.msra.mxu0 %v361
    %430 = vmatprep.subr.mxu0 0.0
    %431 = vmatpush1.msra.mxu0 %v362
    %432 = vmatprep.subr.mxu0 0.0
    %433 = vmatpush1.msra.mxu0 %v363
    %434 = vmatprep.subr.mxu0 0.0
    %435 = vmatpush1.msra.mxu0 %v364
    %436 = vmatprep.mubr.f32.mxu0 %v302
    %437 = vmatmul.mubr.f32.gmra.mrb[0].mxu0 %v301
    %v438 = vpop.f32.mrb[0].mxu0
    %v439 = vadd.f32 %v370, %v438
    %v440 = vpop.f32.mrb[0].mxu0
    %441 = vmatprep.mubr.f32.mxu0 %v304
    %442 = vmatmul.mubr.f32.gmra.mrb[0].mxu0 %v303
    %v443 = vpop.f32.mrb[0].mxu0
    %v444 = vadd.f32 %v370, %v443
    %v445 = vpop.f32.mrb[0].mxu0
    %446 = vmatprep.mubr.f32.mxu0 %v306
    %447 = vmatmul.mubr.f32.gmra.mrb[0].mxu0 %v305
    %v448 = vpop.f32.mrb[0].mxu0
    %v449 = vadd.f32 %v370, %v448
    %v450 = vpop.f32.mrb[0].mxu0
    %451 = vmatprep.mubr.f32.mxu0 %v308
    %452 = vmatmul.mubr.f32.gmra.mrb[0].mxu0 %v307
    %v453 = vpop.f32.mrb[0].mxu0
    %v454 = vadd.f32 %v370, %v453
    %v455 = vpop.f32.mrb[0].mxu0
    %456 = vmatprep.mubr.f32.mxu0 %v310
    %457 = vmatmul.mubr.f32.gmra.mrb[0].mxu0 %v309
    %v458 = vpop.f32.mrb[0].mxu0
    %v459 = vadd.f32 %v370, %v458
    %v460 = vpop.f32.mrb[0].mxu0
    %461 = vmatprep.mubr.f32.mxu0 %v312
    %462 = vmatmul.mubr.f32.gmra.mrb[0].mxu0 %v311
    %v463 = vpop.f32.mrb[0].mxu0
    %v464 = vadd.f32 %v370, %v463
    %v465 = vpop.f32.mrb[0].mxu0
    %466 = vmatprep.mubr.f32.mxu0 %v314
    %467 = vmatmul.mubr.f32.gmra.mrb[0].mxu0 %v313
    %v468 = vpop.f32.mrb[0].mxu0
    %v469 = vadd.f32 %v370, %v468
    %v470 = vpop.f32.mrb[0].mxu0
    %471 = vmatprep.mubr.f32.mxu0 %v316
    %472 = vmatmul.mubr.f32.gmra.mrb[0].mxu0 %v315
    %v473 = vpop.f32.mrb[0].mxu0
    %v474 = vadd.f32 %v370, %v473
    %v475 = vpop.f32.mrb[0].mxu0
    %476 = vmatprep.mubr.f32.mxu0 %v318
    %477 = vmatmul.mubr.f32.gmra.mrb[0].mxu0 %v317
    %v478 = vpop.f32.mrb[0].mxu0
    %v479 = vadd.f32 %v370, %v478
    %v480 = vpop.f32.mrb[0].mxu0
    %481 = vmatprep.mubr.f32.mxu0 %v320
    %482 = vmatmul.mubr.f32.gmra.mrb[0].mxu0 %v319
    %v483 = vpop.f32.mrb[0].mxu0
    %v484 = vadd.f32 %v370, %v483
    %v485 = vpop.f32.mrb[0].mxu0
    %486 = vmatprep.mubr.f32.mxu0 %v322
    %487 = vmatmul.mubr.f32.gmra.mrb[0].mxu0 %v321
    %v488 = vpop.f32.mrb[0].mxu0
    %v489 = vadd.f32 %v370, %v488
    %v490 = vpop.f32.mrb[0].mxu0
    %491 = vmatprep.mubr.f32.mxu0 %v324
    %492 = vmatmul.mubr.f32.gmra.mrb[0].mxu0 %v323
    %v493 = vpop.f32.mrb[0].mxu0
    %v494 = vadd.f32 %v370, %v493
    %v495 = vpop.f32.mrb[0].mxu0
    %496 = vmatprep.mubr.f32.mxu0 %v326
    %497 = vmatmul.mubr.f32.gmra.mrb[0].mxu0 %v325
    %v498 = vpop.f32.mrb[0].mxu0
    %v499 = vadd.f32 %v370, %v498
    %v500 = vpop.f32.mrb[0].mxu0
    %501 = vmatprep.mubr.f32.mxu0 %v328
    %502 = vmatmul.mubr.f32.gmra.mrb[0].mxu0 %v327
    %v503 = vpop.f32.mrb[0].mxu0
    %v504 = vadd.f32 %v370, %v503
    %v505 = vpop.f32.mrb[0].mxu0
    %506 = vmatprep.mubr.f32.mxu0 %v330
    %507 = vmatmul.mubr.f32.gmra.mrb[0].mxu0 %v329
    %v508 = vpop.f32.mrb[0].mxu0
    %v509 = vadd.f32 %v370, %v508
    %v510 = vpop.f32.mrb[0].mxu0
    %511 = vmatprep.mubr.f32.mxu0 %v332
    %512 = vmatmul.mubr.f32.gmra.mrb[0].mxu0 %v331
    %v513 = vpop.f32.mrb[0].mxu0
    %v514 = vadd.f32 %v370, %v513
    %v515 = vpop.f32.mrb[0].mxu0
    %516 = vdwg.mxu0
    %v517 = vtanh.pop %v439
    %v518 = vtanh.pop %v444
    %v519 = vtanh.pop %v449
    %v520 = vtanh.pop %v454
    %v521 = vtanh.pop %v459
    %v522 = vtanh.pop %v464
    %v523 = vtanh.pop %v469
    %v524 = vtanh.pop %v474
    %v525 = vtanh.pop %v479
    %v526 = vtanh.pop %v484
    %v527 = vtanh.pop %v489
    %v528 = vtanh.pop %v494
    %v529 = vtanh.pop %v499
    %v530 = vtanh.pop %v504
    %v531 = vtanh.pop %v509
    %v532 = vtanh.pop %v514
    %533 = vst [vmem:[%s4] sm:$0xff] %v517
    %534 = vst [vmem:[%s4 + $0x8] sm:$0xff] %v518
    %535 = vst [vmem:[%s4 + $0x10] sm:$0xff] %v519
    %536 = vst [vmem:[%s4 + $0x18] sm:$0xff] %v520
    %537 = vst [vmem:[%s4 + $0x20] sm:$0xff] %v521
    %538 = vst [vmem:[%s4 + $0x28] sm:$0xff] %v522
    %539 = vst [vmem:[%s4 + $0x30] sm:$0xff] %v523
    %540 = vst [vmem:[%s4 + $0x38] sm:$0xff] %v524
    %541 = vst [vmem:[%s4 + $0x40] sm:$0xff] %v525
    %542 = vst [vmem:[%s4 + $0x48] sm:$0xff] %v526
    %543 = vst [vmem:[%s4 + $0x50] sm:$0xff] %v527
    %544 = vst [vmem:[%s4 + $0x58] sm:$0xff] %v528
    %545 = vst [vmem:[%s4 + $0x60] sm:$0xff] %v529
    %546 = vst [vmem:[%s4 + $0x68] sm:$0xff] %v530
    %547 = vst [vmem:[%s4 + $0x70] sm:$0xff] %v531
    %548 = vst [vmem:[%s4 + $0x78] sm:$0xff] %v532
  $region25: #{improved_gcn_forward.2} parent=0 // pred_fallthru
    _
  // Predicated region
  $region26: #{improved_gcn_forward.2} parent=0 // pred_check
    _
  $region27: #{improved_gcn_forward.2} parent=0 // pred_check_branch
    %550 = sbr.rel (0) target = $region29
  $region28: #{improved_gcn_forward.2} parent=0 // pred_region
    _
  $region29: #{improved_gcn_forward.2} parent=0 // pred_fallthru
    _
  // Predicated region
  $region30: #{improved_gcn_forward.2} parent=0 // pred_check
    _
  $region31: #{improved_gcn_forward.2} parent=0 // pred_check_branch
    %552 = sbr.rel (0) target = $region33
  $region32: #{improved_gcn_forward.2} parent=0 // pred_region
    _
  $region33: #{improved_gcn_forward.2} parent=0 // pred_fallthru
    _

</llo_original>
